<compile_context>
chip_gen: v5e
topology: v5e:2x2
jax: 0.10.0
libtpu: 0.0.40
codegen_flags: <defaults>
</compile_context>

<pallas_src>
import jax
import jax.numpy as jnp
from jax import lax
from jax.experimental import pallas as pl
from jax.experimental.pallas import tpu as pltpu

IN_FEATS = 4
HIDDEN = 64            # logical LSTM hidden size (as in the PyTorch module)
HP = 128               # lane-padded per-gate width inside the kernel
PITCH_DIM = 127
HEAD_DIM = 1 + PITCH_DIM + 1 + 1   # [on | pitch | vel | delay] = 130
HEAD_PAD = 256                     # lane-dense padded head width

BF16_RECURRENT_MM = False          # flip on v6e/v7x after tolerance check


def lofi_rnn_kernel(x_ref, w_ih_ref, w_hh_ref, b_ref,
                    w_head_ref, b_head_ref, out_ref):
    """x_ref: (T, B, F) time-major.  Weights are gate-padded to Hp=128 lanes.

    w_ih_ref : (F, 4*Hp)    w_hh_ref : (Hp, 4*Hp)    b_ref : (1, 4*Hp)
    w_head_ref : (Hp, HEAD_PAD)   b_head_ref : (1, HEAD_PAD)
    out_ref : (B, HEAD_PAD)
    """
    T, B, F = x_ref.shape
    Hp = w_hh_ref.shape[0]
    G4 = w_hh_ref.shape[1]          # 4 * Hp

    mm_dtype = jnp.bfloat16 if BF16_RECURRENT_MM else jnp.float32

    # --- Hoisted input projection: one matmul + one bias broadcast ----------
    x = x_ref[...].reshape(T * B, F)                       # free reshape
    xw = (jnp.dot(x, w_ih_ref[...], preferred_element_type=jnp.float32)
          + b_ref[...]).reshape(T, B, G4)                  # (T, B, 4*Hp)

    w_hh = w_hh_ref[...].astype(mm_dtype)                  # (Hp, 4*Hp)

    # --- Fully unrolled recurrence (T is small and static) ------------------
    h = jnp.zeros((B, Hp), jnp.float32)
    c = jnp.zeros((B, Hp), jnp.float32)
    for t in range(T):
        gates = xw[t] + jnp.dot(h.astype(mm_dtype), w_hh,
                                preferred_element_type=jnp.float32)
        # Lane-aligned full-vreg gate slices (Hp = 128).
        i = jax.nn.sigmoid(gates[:, 0 * Hp:1 * Hp])
        f = jax.nn.sigmoid(gates[:, 1 * Hp:2 * Hp])
        g = jnp.tanh(gates[:, 2 * Hp:3 * Hp])
        o = jax.nn.sigmoid(gates[:, 3 * Hp:4 * Hp])
        c = f * c + i * g
        h = o * jnp.tanh(c)

    # --- Fused heads: single matmul, single lane-dense store ----------------
    out_ref[...] = (jnp.dot(h, w_head_ref[...],
                            preferred_element_type=jnp.float32)
                    + b_head_ref[...])


def init_params(key, in_feats=IN_FEATS, hidden=HIDDEN):
    """Deterministic synthetic parameters matching nn.LSTM / nn.Linear shapes
    (stored transposed, i.e. (in, out), with LSTM biases pre-summed)."""
    ks = jax.random.split(key, 12)
    s = 1.0 / jnp.sqrt(hidden)

    def u(k, shape):
        return jax.random.uniform(k, shape, jnp.float32, -s, s)

    return {
        "w_ih_t": u(ks[0], (in_feats, 4 * hidden)),
        "w_hh_t": u(ks[1], (hidden, 4 * hidden)),
        "b_lstm": (u(ks[2], (1, 4 * hidden)) + u(ks[3], (1, 4 * hidden))),
        "w_on": u(ks[4], (hidden, 1)),       "b_on": u(ks[5], (1, 1)),
        "w_pitch": u(ks[6], (hidden, PITCH_DIM)),
        "b_pitch": u(ks[7], (1, PITCH_DIM)),
        "w_vel": u(ks[8], (hidden, 1)),      "b_vel": u(ks[9], (1, 1)),
        "w_del": u(ks[10], (hidden, 1)),     "b_del": u(ks[11], (1, 1)),
    }


def pack_params(params, hidden=HIDDEN, hp=HP):
    """One-time repack of reference-layout params into the lane-padded kernel
    layout (each gate padded H -> Hp; four heads fused into one padded slab)."""

    def pad_gates(w):  # (in, 4H) -> (in, 4Hp), zero-padded per gate
        in_dim = w.shape[0]
        out = jnp.zeros((in_dim, 4 * hp), jnp.float32)
        for k in range(4):
            out = out.at[:, k * hp:k * hp + hidden].set(
                w[:, k * hidden:(k + 1) * hidden])
        return out

    w_ih_p = pad_gates(params["w_ih_t"])                       # (F, 4Hp)
    w_hh_p = jnp.zeros((hp, 4 * hp), jnp.float32)
    w_hh_p = w_hh_p.at[:hidden, :].set(pad_gates(params["w_hh_t"]))
    b_p = pad_gates(params["b_lstm"])                          # (1, 4Hp)

    # Fused head columns: [0]=on, [1:128]=pitch, [128]=vel, [129]=delay.
    w_head = jnp.zeros((hp, HEAD_PAD), jnp.float32)
    w_head = w_head.at[:hidden, 0:1].set(params["w_on"])
    w_head = w_head.at[:hidden, 1:1 + PITCH_DIM].set(params["w_pitch"])
    w_head = w_head.at[:hidden, 1 + PITCH_DIM:2 + PITCH_DIM].set(params["w_vel"])
    w_head = w_head.at[:hidden, 2 + PITCH_DIM:3 + PITCH_DIM].set(params["w_del"])

    b_head = jnp.zeros((1, HEAD_PAD), jnp.float32)
    b_head = b_head.at[:, 0:1].set(params["b_on"])
    b_head = b_head.at[:, 1:1 + PITCH_DIM].set(params["b_pitch"])
    b_head = b_head.at[:, 1 + PITCH_DIM:2 + PITCH_DIM].set(params["b_vel"])
    b_head = b_head.at[:, 2 + PITCH_DIM:3 + PITCH_DIM].set(params["b_del"])

    return {"w_ih_p": w_ih_p, "w_hh_p": w_hh_p, "b_p": b_p,
            "w_head": w_head, "b_head": b_head}


def lofi_rnn_forward(x, packed):
    """x: (B, T, IN_FEATS) float32 -> (on, pitch, vel, delay)."""
    B, T, F = x.shape
    Bp = max(8, ((B + 7) // 8) * 8)          # fill sublanes / MXU rows

    # Pad batch with zero rows (dropped below) and go time-major so xw[t]
    # inside the kernel is a cheap leading-axis slice of full (8,128) tiles.
    x_p = jnp.zeros((Bp, T, F), x.dtype).at[:B].set(x)
    x_tm = jnp.swapaxes(x_p, 0, 1)           # (T, Bp, F)

    vmem = pl.BlockSpec(memory_space=pltpu.MemorySpace.VMEM)
    fused = pl.pallas_call(
        lofi_rnn_kernel,
        out_shape=jax.ShapeDtypeStruct((Bp, HEAD_PAD), jnp.float32),
        in_specs=[vmem] * 6,
        out_specs=vmem,
    )(x_tm, packed["w_ih_p"], packed["w_hh_p"], packed["b_p"],
      packed["w_head"], packed["b_head"])

    on = jax.nn.sigmoid(fused[:B, 0:1])
    pitch = fused[:B, 1:1 + PITCH_DIM]
    vel = fused[:B, 1 + PITCH_DIM:2 + PITCH_DIM]
    dly = fused[:B, 2 + PITCH_DIM:3 + PITCH_DIM]
    return on, pitch, vel, dly


def lofi_rnn_reference(x, params):
    """Pure-JAX reference of the PyTorch forward for a correctness check."""
    B, T, _ = x.shape
    H = HIDDEN

    def step(carry, x_t):
        h, c = carry
        gates = x_t @ params["w_ih_t"] + h @ params["w_hh_t"] + params["b_lstm"]
        i = jax.nn.sigmoid(gates[:, 0 * H:1 * H])
        f = jax.nn.sigmoid(gates[:, 1 * H:2 * H])
        g = jnp.tanh(gates[:, 2 * H:3 * H])
        o = jax.nn.sigmoid(gates[:, 3 * H:4 * H])
        c = f * c + i * g
        h = o * jnp.tanh(c)
        return (h, c), None

    (h, _), _ = lax.scan(step, (jnp.zeros((B, H)), jnp.zeros((B, H))),
                         jnp.swapaxes(x, 0, 1))
    on = jax.nn.sigmoid(h @ params["w_on"] + params["b_on"])
    pitch = h @ params["w_pitch"] + params["b_pitch"]
    vel = h @ params["w_vel"] + params["b_vel"]
    dly = h @ params["w_del"] + params["b_del"]
    return on, pitch, vel, dly


if __name__ == "__main__":
    key = jax.random.PRNGKey(0)
    kx, kp = jax.random.split(key)

    B, T = 2, 8                         # batch=2, seq=8, in_feats=4
    x = jax.random.normal(kx, (B, T, IN_FEATS), jnp.float32)
    params = init_params(kp)
    packed = pack_params(params)        # one-time weight repack

    outs = lofi_rnn_forward(x, packed)
    outs = jax.block_until_ready(outs)

    refs = lofi_rnn_reference(x, params)
    for o, r in zip(outs, refs):
        assert o.shape == r.shape
        assert jnp.allclose(o, r, rtol=1e-4, atol=1e-4), "mismatch vs reference"

    print("KERNEL_OK")
</pallas_src>

<mosaic_0001>
module attributes {stable_mosaic.version = 11 : i64} {
  func.func @lofi_rnn_kernel(%arg0: memref<8x8x4xf32, #tpu.memory_space<vmem>>, %arg1: memref<4x512xf32, #tpu.memory_space<vmem>>, %arg2: memref<128x512xf32, #tpu.memory_space<vmem>>, %arg3: memref<1x512xf32, #tpu.memory_space<vmem>>, %arg4: memref<128x256xf32, #tpu.memory_space<vmem>>, %arg5: memref<1x256xf32, #tpu.memory_space<vmem>>, %arg6: memref<8x256xf32, #tpu.memory_space<vmem>>) attributes {dimension_semantics = [], scalar_prefetch = 0 : i64, scratch_operands = 0 : i64, tpu.core_type = #tpu.core_type<tc>} {
    %c0 = arith.constant 0 : index
    %c0_0 = arith.constant 0 : index
    %c0_1 = arith.constant 0 : index
    %0 = vector.load %arg0[%c0, %c0_0, %c0_1] : memref<8x8x4xf32, #tpu.memory_space<vmem>>, vector<8x8x4xf32>
    %1 = vector.shape_cast %0 : vector<8x8x4xf32> to vector<64x4xf32>
    %c0_2 = arith.constant 0 : index
    %c0_3 = arith.constant 0 : index
    %2 = vector.load %arg1[%c0_2, %c0_3] : memref<4x512xf32, #tpu.memory_space<vmem>>, vector<4x512xf32>
    %cst = arith.constant dense<0.000000e+00> : vector<64x512xf32>
    %3 = tpu.matmul %1, %2, %cst {dimension_numbers = #tpu.dot_dimension_numbers<[1], [0], [0], [1], [0, 0, 1, 1], [], []>} : vector<64x4xf32>, vector<4x512xf32>, vector<64x512xf32> -> vector<64x512xf32>
    %c0_4 = arith.constant 0 : index
    %c0_5 = arith.constant 0 : index
    %4 = vector.load %arg3[%c0_4, %c0_5] : memref<1x512xf32, #tpu.memory_space<vmem>>, vector<1x512xf32>
    %5 = vector.broadcast %4 : vector<1x512xf32> to vector<64x512xf32>
    %6 = arith.addf %3, %5 : vector<64x512xf32>
    %7 = vector.shape_cast %6 : vector<64x512xf32> to vector<8x8x512xf32>
    %c0_6 = arith.constant 0 : index
    %c0_7 = arith.constant 0 : index
    %8 = vector.load %arg2[%c0_6, %c0_7] : memref<128x512xf32, #tpu.memory_space<vmem>>, vector<128x512xf32>
    %cst_8 = arith.constant 0.000000e+00 : f32
    %9 = vector.broadcast %cst_8 : f32 to vector<8x128xf32>
    %cst_9 = arith.constant 0.000000e+00 : f32
    %10 = vector.broadcast %cst_9 : f32 to vector<8x128xf32>
    %11 = vector.extract_strided_slice %7 {offsets = [0, 0, 0], sizes = [1, 8, 512], strides = [1, 1, 1]} : vector<8x8x512xf32> to vector<1x8x512xf32>
    %12 = vector.shape_cast %11 : vector<1x8x512xf32> to vector<8x512xf32>
    %cst_10 = arith.constant dense<0.000000e+00> : vector<8x512xf32>
    %13 = tpu.matmul %9, %8, %cst_10 {dimension_numbers = #tpu.dot_dimension_numbers<[1], [0], [0], [1], [0, 0, 1, 1], [], []>} : vector<8x128xf32>, vector<128x512xf32>, vector<8x512xf32> -> vector<8x512xf32>
    %14 = arith.addf %12, %13 : vector<8x512xf32>
    %15 = vector.extract_strided_slice %14 {offsets = [0, 0], sizes = [8, 128], strides = [1, 1]} : vector<8x512xf32> to vector<8x128xf32>
    %16 = arith.negf %15 : vector<8x128xf32>
    %17 = math.exp %16 : vector<8x128xf32>
    %cst_11 = arith.constant 1.000000e+00 : f32
    %18 = vector.broadcast %cst_11 : f32 to vector<8x128xf32>
    %19 = arith.addf %18, %17 : vector<8x128xf32>
    %20 = arith.divf %18, %19 : vector<8x128xf32>
    %21 = vector.extract_strided_slice %14 {offsets = [0, 128], sizes = [8, 128], strides = [1, 1]} : vector<8x512xf32> to vector<8x128xf32>
    %22 = arith.negf %21 : vector<8x128xf32>
    %23 = math.exp %22 : vector<8x128xf32>
    %cst_12 = arith.constant 1.000000e+00 : f32
    %24 = vector.broadcast %cst_12 : f32 to vector<8x128xf32>
    %25 = arith.addf %24, %23 : vector<8x128xf32>
    %26 = arith.divf %24, %25 : vector<8x128xf32>
    %27 = vector.extract_strided_slice %14 {offsets = [0, 256], sizes = [8, 128], strides = [1, 1]} : vector<8x512xf32> to vector<8x128xf32>
    %28 = math.tanh %27 : vector<8x128xf32>
    %29 = vector.extract_strided_slice %14 {offsets = [0, 384], sizes = [8, 128], strides = [1, 1]} : vector<8x512xf32> to vector<8x128xf32>
    %30 = arith.negf %29 : vector<8x128xf32>
    %31 = math.exp %30 : vector<8x128xf32>
    %cst_13 = arith.constant 1.000000e+00 : f32
    %32 = vector.broadcast %cst_13 : f32 to vector<8x128xf32>
    %33 = arith.addf %32, %31 : vector<8x128xf32>
    %34 = arith.divf %32, %33 : vector<8x128xf32>
    %35 = arith.mulf %26, %10 : vector<8x128xf32>
    %36 = arith.mulf %20, %28 : vector<8x128xf32>
    %37 = arith.addf %35, %36 : vector<8x128xf32>
    %38 = math.tanh %37 : vector<8x128xf32>
    %39 = arith.mulf %34, %38 : vector<8x128xf32>
    %40 = vector.extract_strided_slice %7 {offsets = [1, 0, 0], sizes = [1, 8, 512], strides = [1, 1, 1]} : vector<8x8x512xf32> to vector<1x8x512xf32>
    %41 = vector.shape_cast %40 : vector<1x8x512xf32> to vector<8x512xf32>
    %cst_14 = arith.constant dense<0.000000e+00> : vector<8x512xf32>
    %42 = tpu.matmul %39, %8, %cst_14 {dimension_numbers = #tpu.dot_dimension_numbers<[1], [0], [0], [1], [0, 0, 1, 1], [], []>} : vector<8x128xf32>, vector<128x512xf32>, vector<8x512xf32> -> vector<8x512xf32>
    %43 = arith.addf %41, %42 : vector<8x512xf32>
    %44 = vector.extract_strided_slice %43 {offsets = [0, 0], sizes = [8, 128], strides = [1, 1]} : vector<8x512xf32> to vector<8x128xf32>
    %45 = arith.negf %44 : vector<8x128xf32>
    %46 = math.exp %45 : vector<8x128xf32>
    %cst_15 = arith.constant 1.000000e+00 : f32
    %47 = vector.broadcast %cst_15 : f32 to vector<8x128xf32>
    %48 = arith.addf %47, %46 : vector<8x128xf32>
    %49 = arith.divf %47, %48 : vector<8x128xf32>
    %50 = vector.extract_strided_slice %43 {offsets = [0, 128], sizes = [8, 128], strides = [1, 1]} : vector<8x512xf32> to vector<8x128xf32>
    %51 = arith.negf %50 : vector<8x128xf32>
    %52 = math.exp %51 : vector<8x128xf32>
    %cst_16 = arith.constant 1.000000e+00 : f32
    %53 = vector.broadcast %cst_16 : f32 to vector<8x128xf32>
    %54 = arith.addf %53, %52 : vector<8x128xf32>
    %55 = arith.divf %53, %54 : vector<8x128xf32>
    %56 = vector.extract_strided_slice %43 {offsets = [0, 256], sizes = [8, 128], strides = [1, 1]} : vector<8x512xf32> to vector<8x128xf32>
    %57 = math.tanh %56 : vector<8x128xf32>
    %58 = vector.extract_strided_slice %43 {offsets = [0, 384], sizes = [8, 128], strides = [1, 1]} : vector<8x512xf32> to vector<8x128xf32>
    %59 = arith.negf %58 : vector<8x128xf32>
    %60 = math.exp %59 : vector<8x128xf32>
    %cst_17 = arith.constant 1.000000e+00 : f32
    %61 = vector.broadcast %cst_17 : f32 to vector<8x128xf32>
    %62 = arith.addf %61, %60 : vector<8x128xf32>
    %63 = arith.divf %61, %62 : vector<8x128xf32>
    %64 = arith.mulf %55, %37 : vector<8x128xf32>
    %65 = arith.mulf %49, %57 : vector<8x128xf32>
    %66 = arith.addf %64, %65 : vector<8x128xf32>
    %67 = math.tanh %66 : vector<8x128xf32>
    %68 = arith.mulf %63, %67 : vector<8x128xf32>
    %69 = vector.extract_strided_slice %7 {offsets = [2, 0, 0], sizes = [1, 8, 512], strides = [1, 1, 1]} : vector<8x8x512xf32> to vector<1x8x512xf32>
    %70 = vector.shape_cast %69 : vector<1x8x512xf32> to vector<8x512xf32>
    %cst_18 = arith.constant dense<0.000000e+00> : vector<8x512xf32>
    %71 = tpu.matmul %68, %8, %cst_18 {dimension_numbers = #tpu.dot_dimension_numbers<[1], [0], [0], [1], [0, 0, 1, 1], [], []>} : vector<8x128xf32>, vector<128x512xf32>, vector<8x512xf32> -> vector<8x512xf32>
    %72 = arith.addf %70, %71 : vector<8x512xf32>
    %73 = vector.extract_strided_slice %72 {offsets = [0, 0], sizes = [8, 128], strides = [1, 1]} : vector<8x512xf32> to vector<8x128xf32>
    %74 = arith.negf %73 : vector<8x128xf32>
    %75 = math.exp %74 : vector<8x128xf32>
    %cst_19 = arith.constant 1.000000e+00 : f32
    %76 = vector.broadcast %cst_19 : f32 to vector<8x128xf32>
    %77 = arith.addf %76, %75 : vector<8x128xf32>
    %78 = arith.divf %76, %77 : vector<8x128xf32>
    %79 = vector.extract_strided_slice %72 {offsets = [0, 128], sizes = [8, 128], strides = [1, 1]} : vector<8x512xf32> to vector<8x128xf32>
    %80 = arith.negf %79 : vector<8x128xf32>
    %81 = math.exp %80 : vector<8x128xf32>
    %cst_20 = arith.constant 1.000000e+00 : f32
    %82 = vector.broadcast %cst_20 : f32 to vector<8x128xf32>
    %83 = arith.addf %82, %81 : vector<8x128xf32>
    %84 = arith.divf %82, %83 : vector<8x128xf32>
    %85 = vector.extract_strided_slice %72 {offsets = [0, 256], sizes = [8, 128], strides = [1, 1]} : vector<8x512xf32> to vector<8x128xf32>
    %86 = math.tanh %85 : vector<8x128xf32>
    %87 = vector.extract_strided_slice %72 {offsets = [0, 384], sizes = [8, 128], strides = [1, 1]} : vector<8x512xf32> to vector<8x128xf32>
    %88 = arith.negf %87 : vector<8x128xf32>
    %89 = math.exp %88 : vector<8x128xf32>
    %cst_21 = arith.constant 1.000000e+00 : f32
    %90 = vector.broadcast %cst_21 : f32 to vector<8x128xf32>
    %91 = arith.addf %90, %89 : vector<8x128xf32>
    %92 = arith.divf %90, %91 : vector<8x128xf32>
    %93 = arith.mulf %84, %66 : vector<8x128xf32>
    %94 = arith.mulf %78, %86 : vector<8x128xf32>
    %95 = arith.addf %93, %94 : vector<8x128xf32>
    %96 = math.tanh %95 : vector<8x128xf32>
    %97 = arith.mulf %92, %96 : vector<8x128xf32>
    %98 = vector.extract_strided_slice %7 {offsets = [3, 0, 0], sizes = [1, 8, 512], strides = [1, 1, 1]} : vector<8x8x512xf32> to vector<1x8x512xf32>
    %99 = vector.shape_cast %98 : vector<1x8x512xf32> to vector<8x512xf32>
    %cst_22 = arith.constant dense<0.000000e+00> : vector<8x512xf32>
    %100 = tpu.matmul %97, %8, %cst_22 {dimension_numbers = #tpu.dot_dimension_numbers<[1], [0], [0], [1], [0, 0, 1, 1], [], []>} : vector<8x128xf32>, vector<128x512xf32>, vector<8x512xf32> -> vector<8x512xf32>
    %101 = arith.addf %99, %100 : vector<8x512xf32>
    %102 = vector.extract_strided_slice %101 {offsets = [0, 0], sizes = [8, 128], strides = [1, 1]} : vector<8x512xf32> to vector<8x128xf32>
    %103 = arith.negf %102 : vector<8x128xf32>
    %104 = math.exp %103 : vector<8x128xf32>
    %cst_23 = arith.constant 1.000000e+00 : f32
    %105 = vector.broadcast %cst_23 : f32 to vector<8x128xf32>
    %106 = arith.addf %105, %104 : vector<8x128xf32>
    %107 = arith.divf %105, %106 : vector<8x128xf32>
    %108 = vector.extract_strided_slice %101 {offsets = [0, 128], sizes = [8, 128], strides = [1, 1]} : vector<8x512xf32> to vector<8x128xf32>
    %109 = arith.negf %108 : vector<8x128xf32>
    %110 = math.exp %109 : vector<8x128xf32>
    %cst_24 = arith.constant 1.000000e+00 : f32
    %111 = vector.broadcast %cst_24 : f32 to vector<8x128xf32>
    %112 = arith.addf %111, %110 : vector<8x128xf32>
    %113 = arith.divf %111, %112 : vector<8x128xf32>
    %114 = vector.extract_strided_slice %101 {offsets = [0, 256], sizes = [8, 128], strides = [1, 1]} : vector<8x512xf32> to vector<8x128xf32>
    %115 = math.tanh %114 : vector<8x128xf32>
    %116 = vector.extract_strided_slice %101 {offsets = [0, 384], sizes = [8, 128], strides = [1, 1]} : vector<8x512xf32> to vector<8x128xf32>
    %117 = arith.negf %116 : vector<8x128xf32>
    %118 = math.exp %117 : vector<8x128xf32>
    %cst_25 = arith.constant 1.000000e+00 : f32
    %119 = vector.broadcast %cst_25 : f32 to vector<8x128xf32>
    %120 = arith.addf %119, %118 : vector<8x128xf32>
    %121 = arith.divf %119, %120 : vector<8x128xf32>
    %122 = arith.mulf %113, %95 : vector<8x128xf32>
    %123 = arith.mulf %107, %115 : vector<8x128xf32>
    %124 = arith.addf %122, %123 : vector<8x128xf32>
    %125 = math.tanh %124 : vector<8x128xf32>
    %126 = arith.mulf %121, %125 : vector<8x128xf32>
    %127 = vector.extract_strided_slice %7 {offsets = [4, 0, 0], sizes = [1, 8, 512], strides = [1, 1, 1]} : vector<8x8x512xf32> to vector<1x8x512xf32>
    %128 = vector.shape_cast %127 : vector<1x8x512xf32> to vector<8x512xf32>
    %cst_26 = arith.constant dense<0.000000e+00> : vector<8x512xf32>
    %129 = tpu.matmul %126, %8, %cst_26 {dimension_numbers = #tpu.dot_dimension_numbers<[1], [0], [0], [1], [0, 0, 1, 1], [], []>} : vector<8x128xf32>, vector<128x512xf32>, vector<8x512xf32> -> vector<8x512xf32>
    %130 = arith.addf %128, %129 : vector<8x512xf32>
    %131 = vector.extract_strided_slice %130 {offsets = [0, 0], sizes = [8, 128], strides = [1, 1]} : vector<8x512xf32> to vector<8x128xf32>
    %132 = arith.negf %131 : vector<8x128xf32>
    %133 = math.exp %132 : vector<8x128xf32>
    %cst_27 = arith.constant 1.000000e+00 : f32
    %134 = vector.broadcast %cst_27 : f32 to vector<8x128xf32>
    %135 = arith.addf %134, %133 : vector<8x128xf32>
    %136 = arith.divf %134, %135 : vector<8x128xf32>
    %137 = vector.extract_strided_slice %130 {offsets = [0, 128], sizes = [8, 128], strides = [1, 1]} : vector<8x512xf32> to vector<8x128xf32>
    %138 = arith.negf %137 : vector<8x128xf32>
    %139 = math.exp %138 : vector<8x128xf32>
    %cst_28 = arith.constant 1.000000e+00 : f32
    %140 = vector.broadcast %cst_28 : f32 to vector<8x128xf32>
    %141 = arith.addf %140, %139 : vector<8x128xf32>
    %142 = arith.divf %140, %141 : vector<8x128xf32>
    %143 = vector.extract_strided_slice %130 {offsets = [0, 256], sizes = [8, 128], strides = [1, 1]} : vector<8x512xf32> to vector<8x128xf32>
    %144 = math.tanh %143 : vector<8x128xf32>
    %145 = vector.extract_strided_slice %130 {offsets = [0, 384], sizes = [8, 128], strides = [1, 1]} : vector<8x512xf32> to vector<8x128xf32>
    %146 = arith.negf %145 : vector<8x128xf32>
    %147 = math.exp %146 : vector<8x128xf32>
    %cst_29 = arith.constant 1.000000e+00 : f32
    %148 = vector.broadcast %cst_29 : f32 to vector<8x128xf32>
    %149 = arith.addf %148, %147 : vector<8x128xf32>
    %150 = arith.divf %148, %149 : vector<8x128xf32>
    %151 = arith.mulf %142, %124 : vector<8x128xf32>
    %152 = arith.mulf %136, %144 : vector<8x128xf32>
    %153 = arith.addf %151, %152 : vector<8x128xf32>
    %154 = math.tanh %153 : vector<8x128xf32>
    %155 = arith.mulf %150, %154 : vector<8x128xf32>
    %156 = vector.extract_strided_slice %7 {offsets = [5, 0, 0], sizes = [1, 8, 512], strides = [1, 1, 1]} : vector<8x8x512xf32> to vector<1x8x512xf32>
    %157 = vector.shape_cast %156 : vector<1x8x512xf32> to vector<8x512xf32>
    %cst_30 = arith.constant dense<0.000000e+00> : vector<8x512xf32>
    %158 = tpu.matmul %155, %8, %cst_30 {dimension_numbers = #tpu.dot_dimension_numbers<[1], [0], [0], [1], [0, 0, 1, 1], [], []>} : vector<8x128xf32>, vector<128x512xf32>, vector<8x512xf32> -> vector<8x512xf32>
    %159 = arith.addf %157, %158 : vector<8x512xf32>
    %160 = vector.extract_strided_slice %159 {offsets = [0, 0], sizes = [8, 128], strides = [1, 1]} : vector<8x512xf32> to vector<8x128xf32>
    %161 = arith.negf %160 : vector<8x128xf32>
    %162 = math.exp %161 : vector<8x128xf32>
    %cst_31 = arith.constant 1.000000e+00 : f32
    %163 = vector.broadcast %cst_31 : f32 to vector<8x128xf32>
    %164 = arith.addf %163, %162 : vector<8x128xf32>
    %165 = arith.divf %163, %164 : vector<8x128xf32>
    %166 = vector.extract_strided_slice %159 {offsets = [0, 128], sizes = [8, 128], strides = [1, 1]} : vector<8x512xf32> to vector<8x128xf32>
    %167 = arith.negf %166 : vector<8x128xf32>
    %168 = math.exp %167 : vector<8x128xf32>
    %cst_32 = arith.constant 1.000000e+00 : f32
    %169 = vector.broadcast %cst_32 : f32 to vector<8x128xf32>
    %170 = arith.addf %169, %168 : vector<8x128xf32>
    %171 = arith.divf %169, %170 : vector<8x128xf32>
    %172 = vector.extract_strided_slice %159 {offsets = [0, 256], sizes = [8, 128], strides = [1, 1]} : vector<8x512xf32> to vector<8x128xf32>
    %173 = math.tanh %172 : vector<8x128xf32>
    %174 = vector.extract_strided_slice %159 {offsets = [0, 384], sizes = [8, 128], strides = [1, 1]} : vector<8x512xf32> to vector<8x128xf32>
    %175 = arith.negf %174 : vector<8x128xf32>
    %176 = math.exp %175 : vector<8x128xf32>
    %cst_33 = arith.constant 1.000000e+00 : f32
    %177 = vector.broadcast %cst_33 : f32 to vector<8x128xf32>
    %178 = arith.addf %177, %176 : vector<8x128xf32>
    %179 = arith.divf %177, %178 : vector<8x128xf32>
    %180 = arith.mulf %171, %153 : vector<8x128xf32>
    %181 = arith.mulf %165, %173 : vector<8x128xf32>
    %182 = arith.addf %180, %181 : vector<8x128xf32>
    %183 = math.tanh %182 : vector<8x128xf32>
    %184 = arith.mulf %179, %183 : vector<8x128xf32>
    %185 = vector.extract_strided_slice %7 {offsets = [6, 0, 0], sizes = [1, 8, 512], strides = [1, 1, 1]} : vector<8x8x512xf32> to vector<1x8x512xf32>
    %186 = vector.shape_cast %185 : vector<1x8x512xf32> to vector<8x512xf32>
    %cst_34 = arith.constant dense<0.000000e+00> : vector<8x512xf32>
    %187 = tpu.matmul %184, %8, %cst_34 {dimension_numbers = #tpu.dot_dimension_numbers<[1], [0], [0], [1], [0, 0, 1, 1], [], []>} : vector<8x128xf32>, vector<128x512xf32>, vector<8x512xf32> -> vector<8x512xf32>
    %188 = arith.addf %186, %187 : vector<8x512xf32>
    %189 = vector.extract_strided_slice %188 {offsets = [0, 0], sizes = [8, 128], strides = [1, 1]} : vector<8x512xf32> to vector<8x128xf32>
    %190 = arith.negf %189 : vector<8x128xf32>
    %191 = math.exp %190 : vector<8x128xf32>
    %cst_35 = arith.constant 1.000000e+00 : f32
    %192 = vector.broadcast %cst_35 : f32 to vector<8x128xf32>
    %193 = arith.addf %192, %191 : vector<8x128xf32>
    %194 = arith.divf %192, %193 : vector<8x128xf32>
    %195 = vector.extract_strided_slice %188 {offsets = [0, 128], sizes = [8, 128], strides = [1, 1]} : vector<8x512xf32> to vector<8x128xf32>
    %196 = arith.negf %195 : vector<8x128xf32>
    %197 = math.exp %196 : vector<8x128xf32>
    %cst_36 = arith.constant 1.000000e+00 : f32
    %198 = vector.broadcast %cst_36 : f32 to vector<8x128xf32>
    %199 = arith.addf %198, %197 : vector<8x128xf32>
    %200 = arith.divf %198, %199 : vector<8x128xf32>
    %201 = vector.extract_strided_slice %188 {offsets = [0, 256], sizes = [8, 128], strides = [1, 1]} : vector<8x512xf32> to vector<8x128xf32>
    %202 = math.tanh %201 : vector<8x128xf32>
    %203 = vector.extract_strided_slice %188 {offsets = [0, 384], sizes = [8, 128], strides = [1, 1]} : vector<8x512xf32> to vector<8x128xf32>
    %204 = arith.negf %203 : vector<8x128xf32>
    %205 = math.exp %204 : vector<8x128xf32>
    %cst_37 = arith.constant 1.000000e+00 : f32
    %206 = vector.broadcast %cst_37 : f32 to vector<8x128xf32>
    %207 = arith.addf %206, %205 : vector<8x128xf32>
    %208 = arith.divf %206, %207 : vector<8x128xf32>
    %209 = arith.mulf %200, %182 : vector<8x128xf32>
    %210 = arith.mulf %194, %202 : vector<8x128xf32>
    %211 = arith.addf %209, %210 : vector<8x128xf32>
    %212 = math.tanh %211 : vector<8x128xf32>
    %213 = arith.mulf %208, %212 : vector<8x128xf32>
    %214 = vector.extract_strided_slice %7 {offsets = [7, 0, 0], sizes = [1, 8, 512], strides = [1, 1, 1]} : vector<8x8x512xf32> to vector<1x8x512xf32>
    %215 = vector.shape_cast %214 : vector<1x8x512xf32> to vector<8x512xf32>
    %cst_38 = arith.constant dense<0.000000e+00> : vector<8x512xf32>
    %216 = tpu.matmul %213, %8, %cst_38 {dimension_numbers = #tpu.dot_dimension_numbers<[1], [0], [0], [1], [0, 0, 1, 1], [], []>} : vector<8x128xf32>, vector<128x512xf32>, vector<8x512xf32> -> vector<8x512xf32>
    %217 = arith.addf %215, %216 : vector<8x512xf32>
    %218 = vector.extract_strided_slice %217 {offsets = [0, 0], sizes = [8, 128], strides = [1, 1]} : vector<8x512xf32> to vector<8x128xf32>
    %219 = arith.negf %218 : vector<8x128xf32>
    %220 = math.exp %219 : vector<8x128xf32>
    %cst_39 = arith.constant 1.000000e+00 : f32
    %221 = vector.broadcast %cst_39 : f32 to vector<8x128xf32>
    %222 = arith.addf %221, %220 : vector<8x128xf32>
    %223 = arith.divf %221, %222 : vector<8x128xf32>
    %224 = vector.extract_strided_slice %217 {offsets = [0, 128], sizes = [8, 128], strides = [1, 1]} : vector<8x512xf32> to vector<8x128xf32>
    %225 = arith.negf %224 : vector<8x128xf32>
    %226 = math.exp %225 : vector<8x128xf32>
    %cst_40 = arith.constant 1.000000e+00 : f32
    %227 = vector.broadcast %cst_40 : f32 to vector<8x128xf32>
    %228 = arith.addf %227, %226 : vector<8x128xf32>
    %229 = arith.divf %227, %228 : vector<8x128xf32>
    %230 = vector.extract_strided_slice %217 {offsets = [0, 256], sizes = [8, 128], strides = [1, 1]} : vector<8x512xf32> to vector<8x128xf32>
    %231 = math.tanh %230 : vector<8x128xf32>
    %232 = vector.extract_strided_slice %217 {offsets = [0, 384], sizes = [8, 128], strides = [1, 1]} : vector<8x512xf32> to vector<8x128xf32>
    %233 = arith.negf %232 : vector<8x128xf32>
    %234 = math.exp %233 : vector<8x128xf32>
    %cst_41 = arith.constant 1.000000e+00 : f32
    %235 = vector.broadcast %cst_41 : f32 to vector<8x128xf32>
    %236 = arith.addf %235, %234 : vector<8x128xf32>
    %237 = arith.divf %235, %236 : vector<8x128xf32>
    %238 = arith.mulf %229, %211 : vector<8x128xf32>
    %239 = arith.mulf %223, %231 : vector<8x128xf32>
    %240 = arith.addf %238, %239 : vector<8x128xf32>
    %241 = math.tanh %240 : vector<8x128xf32>
    %242 = arith.mulf %237, %241 : vector<8x128xf32>
    %c0_42 = arith.constant 0 : index
    %c0_43 = arith.constant 0 : index
    %243 = vector.load %arg4[%c0_42, %c0_43] : memref<128x256xf32, #tpu.memory_space<vmem>>, vector<128x256xf32>
    %cst_44 = arith.constant dense<0.000000e+00> : vector<8x256xf32>
    %244 = tpu.matmul %242, %243, %cst_44 {dimension_numbers = #tpu.dot_dimension_numbers<[1], [0], [0], [1], [0, 0, 1, 1], [], []>} : vector<8x128xf32>, vector<128x256xf32>, vector<8x256xf32> -> vector<8x256xf32>
    %c0_45 = arith.constant 0 : index
    %c0_46 = arith.constant 0 : index
    %245 = vector.load %arg5[%c0_45, %c0_46] : memref<1x256xf32, #tpu.memory_space<vmem>>, vector<1x256xf32>
    %246 = vector.broadcast %245 : vector<1x256xf32> to vector<8x256xf32>
    %247 = arith.addf %244, %246 : vector<8x256xf32>
    %c0_47 = arith.constant 0 : index
    %c0_48 = arith.constant 0 : index
    %248 = vector.load %arg6[%c0_47, %c0_48] : memref<8x256xf32, #tpu.memory_space<vmem>>, vector<8x256xf32>
    tpu.vector_store %arg6[%c0_47, %c0_48], %247 {strides = array<i32>} : memref<8x256xf32, #tpu.memory_space<vmem>>, vector<8x256xf32>,
    return
  }
}

</mosaic_0001>

<llo_original>
// kernel: tpu_custom_call.1
$region0: #{tpu_custom_call.1}
  #allocation0 [shape = 'u32[]', space=smem, size = 0x4, offset = 0x4, fixed_abs, tag = 'smem constant byte address 0x4 - core index']
  #allocation1 [shape = 'u32[72,128]{1,0:T(1,128)}', space=vmem, size = 0x9000, scoped, tag = 'internal scratch']
  %s0 = inlined_call_operand.vmem [shape: f32[8,8,4], index: 0, kind: input, shape index: {}]
  %s1 = inlined_call_operand.vmem [shape: f32[4,512], index: 1, kind: input, shape index: {}]
  %s2 = inlined_call_operand.hbm [shape: f32[128,512], index: 2, kind: input, shape index: {}]
  %s3 = inlined_call_operand.vmem [shape: f32[1,512], index: 3, kind: input, shape index: {}]
  %s4 = inlined_call_operand.hbm [shape: f32[128,256], index: 4, kind: input, shape index: {}]
  %s5 = inlined_call_operand.vmem [shape: f32[1,256], index: 5, kind: input, shape index: {}]
  %s6 = inlined_call_operand.hbm [shape: f32[8,256], index: 6, kind: output, shape index: {}]
  %s7 = sld [smem:[#allocation0]]
  $region42: #{tpu_custom_call.1} parent=0
    _
  %s9 = ssub.s32 1, %s7
  %s10 = scalar_select 0, %s9, %s7
  $region1: #{tpu_custom_call.1} parent=0
    #allocation2 [shape = 'u8[262144]{0}', space=vmem, size = 0x40000, scoped, tag = 'input window, operand 2, single buffered']
    #allocation3 [shape = 's32[1]{0}', space=sflag, size = 0x4, scoped, tag = 'scoped memory for tpu_custom_call.1']
    #allocation4 [shape = 's32[1]{0}', space=sflag, size = 0x4, scoped, tag = 'scoped memory for tpu_custom_call.1']
    #allocation5 [shape = 'u8[131072]{0}', space=vmem, size = 0x20000, scoped, tag = 'input window, operand 4, single buffered']
    #allocation6 [shape = 's32[1]{0}', space=sflag, size = 0x4, scoped, tag = 'scoped memory for tpu_custom_call.1']
    #allocation7 [shape = 'u8[8192]{0}', space=vmem, size = 0x2000, scoped, tag = 'output window, operand 0, single buffered']
    %11 = vsyncpa [#allocation3], 0
    %12 = vsyncpa [#allocation6], 0
    %13 = vsyncpa [#allocation4], 0
    // Predicated region
    $region2: #{tpu_custom_call.1} parent=1 // pred_check
      _
    $region3: #{tpu_custom_call.1} parent=1 // pred_check_branch
      %15 = sbr.rel (0) target = $region5
    $region4: #{tpu_custom_call.1} parent=1 // pred_region
      _
    $region5: #{tpu_custom_call.1} parent=1 // pred_fallthru
      _
    // Predicated region
    $region6: #{tpu_custom_call.1} parent=1 // pred_check
      _
    $region7: #{tpu_custom_call.1} parent=1 // pred_check_branch
      %17 = sbr.rel (0) target = $region9
    $region8: #{tpu_custom_call.1} parent=1 // pred_region
      _
    $region9: #{tpu_custom_call.1} parent=1 // pred_fallthru
      _
    // Predicated region
    $region10: #{tpu_custom_call.1} parent=1 // pred_check
      _
    $region11: #{tpu_custom_call.1} parent=1 // pred_check_branch
      %19 = sbr.rel (0) target = $region13
    $region12: #{tpu_custom_call.1} parent=1 // pred_region
      %21 = vsyncadd [#allocation3], 0
      %s22 = sshll.u32 %s2, 4
      %s23 = int_to_ptr.hbm [resolvable:$true] %s22
      %s24 = sshll.u32 [#allocation2], 4
      %s25 = int_to_ptr.vmem [resolvable:$true] %s24
      %30 = dma.hbm_to_vmem [thread:$0]  %s23, 8192, %s25, [#allocation3], 512, 512, 32
    $region13: #{tpu_custom_call.1} parent=1 // pred_fallthru
      _
    // Predicated region
    $region14: #{tpu_custom_call.1} parent=1 // pred_check
      _
    $region15: #{tpu_custom_call.1} parent=1 // pred_check_branch
      %32 = sbr.rel (0) target = $region17
    $region16: #{tpu_custom_call.1} parent=1 // pred_region
      _
    $region17: #{tpu_custom_call.1} parent=1 // pred_fallthru
      _
    // Predicated region
    $region18: #{tpu_custom_call.1} parent=1 // pred_check
      _
    $region19: #{tpu_custom_call.1} parent=1 // pred_check_branch
      %34 = sbr.rel (0) target = $region21
    $region20: #{tpu_custom_call.1} parent=1 // pred_region
      %36 = vsyncadd [#allocation6], 0
      %s37 = sshll.u32 %s4, 4
      %s38 = int_to_ptr.hbm [resolvable:$true] %s37
      %s39 = sshll.u32 [#allocation5], 4
      %s40 = int_to_ptr.vmem [resolvable:$true] %s39
      %45 = dma.hbm_to_vmem [thread:$0]  %s38, 4096, %s40, [#allocation6], 256, 256, 16
    $region21: #{tpu_custom_call.1} parent=1 // pred_fallthru
      _
    // Predicated region
    $region22: #{tpu_custom_call.1} parent=1 // pred_check
      _
    $region23: #{tpu_custom_call.1} parent=1 // pred_check_branch
      %47 = sbr.rel (0) target = $region25
    $region24: #{tpu_custom_call.1} parent=1 // pred_region
      _
    $region25: #{tpu_custom_call.1} parent=1 // pred_fallthru
      _
    // Predicated region
    $region26: #{tpu_custom_call.1} parent=1 // pred_check
      _
    $region27: #{tpu_custom_call.1} parent=1 // pred_check_branch
      %49 = sbr.rel (0) target = $region29
    $region28: #{tpu_custom_call.1} parent=1 // pred_region
      %51 = dma.done [#allocation3], 8192
    $region29: #{tpu_custom_call.1} parent=1 // pred_fallthru
      _
    // Predicated region
    $region30: #{tpu_custom_call.1} parent=1 // pred_check
      _
    $region31: #{tpu_custom_call.1} parent=1 // pred_check_branch
      %53 = sbr.rel (0) target = $region33
    $region32: #{tpu_custom_call.1} parent=1 // pred_region
      %55 = dma.done [#allocation6], 4096
    $region33: #{tpu_custom_call.1} parent=1 // pred_fallthru
      _
    %v56 = vld [vmem:[%s0] sm:$0xff]
    %v57 = vld [vmem:[%s0 + $0x8] sm:$0xff]
    %v58 = vld [vmem:[%s0 + $0x10] sm:$0xff]
    %v59 = vld [vmem:[%s0 + $0x18] sm:$0xff]
    %v60 = vld [vmem:[%s0 + $0x20] sm:$0xff]
    %v61 = vld [vmem:[%s0 + $0x28] sm:$0xff]
    %v62 = vld [vmem:[%s0 + $0x30] sm:$0xff]
    %v63 = vld [vmem:[%s0 + $0x38] sm:$0xff]
    %v64 = vld [vmem:[%s1] sm:$0xff]
    %v65 = vld [vmem:[%s1 + $0x8] sm:$0xff]
    %v66 = vld [vmem:[%s3] sm:$0xf]
    %v68 = vperm.slane %v66, 0
    %v69 = vperm.slane %v66, 1
    %v70 = vperm.slane %v66, 2
    %v71 = vperm.slane %v66, 3
    %78 = vst [vmem:[#allocation1] ss:$2 sm:$0xff] %v64
    %s79 = scalar_lea.vmem [#allocation1], 16
    %80 = vst [vmem:[%s79] ss:$2 sm:$0xff] %v65
    %v81 = vld.sshfl [vmem:[#allocation1] sm:$0xff pattern:$0x75316420]
    %v82 = vld.sshfl [vmem:[#allocation1 + $0x8] sm:$0xff pattern:$0x75316420]
    %v83 = vld.sshfl [vmem:[#allocation1 + $0x10] sm:$0xff pattern:$0x75316420]
    %v84 = vld.sshfl [vmem:[#allocation1 + $0x18] sm:$0xff pattern:$0x75316420]
    %vm85 = vcmask 31744
    %v87 = vsel %vm85, %v56, 0
    %v90 = vsel %vm85, %v57, 0
    %v93 = vsel %vm85, %v58, 0
    %v96 = vsel %vm85, %v59, 0
    %v99 = vsel %vm85, %v60, 0
    %v102 = vsel %vm85, %v61, 0
    %v105 = vsel %vm85, %v62, 0
    %v108 = vsel %vm85, %v63, 0
    %vm110 = vcmask 1043456
    %v111 = vsel %vm110, %v81, 0
    %v113 = vsel %vm110, %v82, 0
    %v115 = vsel %vm110, %v83, 0
    %v117 = vsel %vm110, %v84, 0
    %119 = vmatpush.msra.mxu0 0.0
    %120 = vmatpush.msra.mxu0 0.0
    %121 = vmatpush.msra.mxu0 0.0
    %122 = vmatpush.msra.mxu0 0.0
    %123 = vmatpush.msra.mxu0 0.0
    %124 = vmatpush.msra.mxu0 0.0
    %125 = vmatpush.msra.mxu0 0.0
    %126 = vmatpush.msra.mxu0 0.0
    %127 = vmatpush.msra.mxu0 0.0
    %128 = vmatpush.msra.mxu0 0.0
    %129 = vmatpush.msra.mxu0 0.0
    %130 = vmatpush.msra.mxu0 0.0
    %131 = vmatpush.msra.mxu0 0.0
    %132 = vmatpush.msra.mxu0 0.0
    %133 = vmatpush.msra.mxu0 0.0
    %134 = vmatpush.msra.mxu0 %v111
    %135 = vmatmul.f32.gmra.mxu0 %v87
    %v136 = vpop.f32.mrf.mxu0
    %v137 = vadd.f32 %v68, %v136
    %138 = vmatmul.f32.gmra.mxu0 %v90
    %v139 = vpop.f32.mrf.mxu0
    %v140 = vadd.f32 %v68, %v139
    %141 = vmatmul.f32.gmra.mxu0 %v93
    %v142 = vpop.f32.mrf.mxu0
    %v143 = vadd.f32 %v68, %v142
    %144 = vmatmul.f32.gmra.mxu0 %v96
    %v145 = vpop.f32.mrf.mxu0
    %v146 = vadd.f32 %v68, %v145
    %147 = vmatmul.f32.gmra.mxu0 %v99
    %v148 = vpop.f32.mrf.mxu0
    %v149 = vadd.f32 %v68, %v148
    %150 = vmatmul.f32.gmra.mxu0 %v102
    %v151 = vpop.f32.mrf.mxu0
    %v152 = vadd.f32 %v68, %v151
    %153 = vmatmul.f32.gmra.mxu0 %v105
    %v154 = vpop.f32.mrf.mxu0
    %v155 = vadd.f32 %v68, %v154
    %156 = vmatmul.f32.gmra.mxu0 %v108
    %v157 = vpop.f32.mrf.mxu0
    %v158 = vadd.f32 %v68, %v157
    %159 = vdwg.mxu0
    %160 = vmatpush.msra.mxu0 0.0
    %161 = vmatpush.msra.mxu0 0.0
    %162 = vmatpush.msra.mxu0 0.0
    %163 = vmatpush.msra.mxu0 0.0
    %164 = vmatpush.msra.mxu0 0.0
    %165 = vmatpush.msra.mxu0 0.0
    %166 = vmatpush.msra.mxu0 0.0
    %167 = vmatpush.msra.mxu0 0.0
    %168 = vmatpush.msra.mxu0 0.0
    %169 = vmatpush.msra.mxu0 0.0
    %170 = vmatpush.msra.mxu0 0.0
    %171 = vmatpush.msra.mxu0 0.0
    %172 = vmatpush.msra.mxu0 0.0
    %173 = vmatpush.msra.mxu0 0.0
    %174 = vmatpush.msra.mxu0 0.0
    %175 = vmatpush.msra.mxu0 %v113
    %176 = vmatmul.f32.gmra.mxu0 %v87
    %v177 = vpop.f32.mrf.mxu0
    %v178 = vadd.f32 %v69, %v177
    %179 = vmatmul.f32.gmra.mxu0 %v90
    %v180 = vpop.f32.mrf.mxu0
    %v181 = vadd.f32 %v69, %v180
    %182 = vmatmul.f32.gmra.mxu0 %v93
    %v183 = vpop.f32.mrf.mxu0
    %v184 = vadd.f32 %v69, %v183
    %185 = vmatmul.f32.gmra.mxu0 %v96
    %v186 = vpop.f32.mrf.mxu0
    %v187 = vadd.f32 %v69, %v186
    %188 = vmatmul.f32.gmra.mxu0 %v99
    %v189 = vpop.f32.mrf.mxu0
    %v190 = vadd.f32 %v69, %v189
    %191 = vmatmul.f32.gmra.mxu0 %v102
    %v192 = vpop.f32.mrf.mxu0
    %v193 = vadd.f32 %v69, %v192
    %194 = vmatmul.f32.gmra.mxu0 %v105
    %v195 = vpop.f32.mrf.mxu0
    %v196 = vadd.f32 %v69, %v195
    %197 = vmatmul.f32.gmra.mxu0 %v108
    %v198 = vpop.f32.mrf.mxu0
    %v199 = vadd.f32 %v69, %v198
    %200 = vdwg.mxu0
    %201 = vmatpush.msra.mxu0 0.0
    %202 = vmatpush.msra.mxu0 0.0
    %203 = vmatpush.msra.mxu0 0.0
    %204 = vmatpush.msra.mxu0 0.0
    %205 = vmatpush.msra.mxu0 0.0
    %206 = vmatpush.msra.mxu0 0.0
    %207 = vmatpush.msra.mxu0 0.0
    %208 = vmatpush.msra.mxu0 0.0
    %209 = vmatpush.msra.mxu0 0.0
    %210 = vmatpush.msra.mxu0 0.0
    %211 = vmatpush.msra.mxu0 0.0
    %212 = vmatpush.msra.mxu0 0.0
    %213 = vmatpush.msra.mxu0 0.0
    %214 = vmatpush.msra.mxu0 0.0
    %215 = vmatpush.msra.mxu0 0.0
    %216 = vmatpush.msra.mxu0 %v115
    %217 = vmatmul.f32.gmra.mxu0 %v87
    %v218 = vpop.f32.mrf.mxu0
    %v219 = vadd.f32 %v70, %v218
    %220 = vmatmul.f32.gmra.mxu0 %v90
    %v221 = vpop.f32.mrf.mxu0
    %v222 = vadd.f32 %v70, %v221
    %223 = vmatmul.f32.gmra.mxu0 %v93
    %v224 = vpop.f32.mrf.mxu0
    %v225 = vadd.f32 %v70, %v224
    %226 = vmatmul.f32.gmra.mxu0 %v96
    %v227 = vpop.f32.mrf.mxu0
    %v228 = vadd.f32 %v70, %v227
    %229 = vmatmul.f32.gmra.mxu0 %v99
    %v230 = vpop.f32.mrf.mxu0
    %v231 = vadd.f32 %v70, %v230
    %232 = vmatmul.f32.gmra.mxu0 %v102
    %v233 = vpop.f32.mrf.mxu0
    %v234 = vadd.f32 %v70, %v233
    %235 = vmatmul.f32.gmra.mxu0 %v105
    %v236 = vpop.f32.mrf.mxu0
    %v237 = vadd.f32 %v70, %v236
    %238 = vmatmul.f32.gmra.mxu0 %v108
    %v239 = vpop.f32.mrf.mxu0
    %v240 = vadd.f32 %v70, %v239
    %241 = vdwg.mxu0
    %242 = vmatpush.msra.mxu0 0.0
    %243 = vmatpush.msra.mxu0 0.0
    %244 = vmatpush.msra.mxu0 0.0
    %245 = vmatpush.msra.mxu0 0.0
    %246 = vmatpush.msra.mxu0 0.0
    %247 = vmatpush.msra.mxu0 0.0
    %248 = vmatpush.msra.mxu0 0.0
    %249 = vmatpush.msra.mxu0 0.0
    %250 = vmatpush.msra.mxu0 0.0
    %251 = vmatpush.msra.mxu0 0.0
    %252 = vmatpush.msra.mxu0 0.0
    %253 = vmatpush.msra.mxu0 0.0
    %254 = vmatpush.msra.mxu0 0.0
    %255 = vmatpush.msra.mxu0 0.0
    %256 = vmatpush.msra.mxu0 0.0
    %257 = vmatpush.msra.mxu0 %v117
    %258 = vmatmul.f32.gmra.mxu0 %v87
    %v259 = vpop.f32.mrf.mxu0
    %v260 = vadd.f32 %v71, %v259
    %261 = vmatmul.f32.gmra.mxu0 %v90
    %v262 = vpop.f32.mrf.mxu0
    %v263 = vadd.f32 %v71, %v262
    %264 = vmatmul.f32.gmra.mxu0 %v93
    %v265 = vpop.f32.mrf.mxu0
    %v266 = vadd.f32 %v71, %v265
    %267 = vmatmul.f32.gmra.mxu0 %v96
    %v268 = vpop.f32.mrf.mxu0
    %v269 = vadd.f32 %v71, %v268
    %270 = vmatmul.f32.gmra.mxu0 %v99
    %v271 = vpop.f32.mrf.mxu0
    %v272 = vadd.f32 %v71, %v271
    %273 = vmatmul.f32.gmra.mxu0 %v102
    %v274 = vpop.f32.mrf.mxu0
    %v275 = vadd.f32 %v71, %v274
    %276 = vmatmul.f32.gmra.mxu0 %v105
    %v277 = vpop.f32.mrf.mxu0
    %v278 = vadd.f32 %v71, %v277
    %279 = vmatmul.f32.gmra.mxu0 %v108
    %v280 = vpop.f32.mrf.mxu0
    %v281 = vadd.f32 %v71, %v280
    %282 = vdwg.mxu0
    %v283 = vld [vmem:[#allocation2] sm:$0xff]
    %v284 = vld [vmem:[#allocation2 + $0x8] sm:$0xff]
    %v285 = vld [vmem:[#allocation2 + $0x10] sm:$0xff]
    %v286 = vld [vmem:[#allocation2 + $0x18] sm:$0xff]
    %v287 = vld [vmem:[#allocation2 + $0x20] sm:$0xff]
    %v288 = vld [vmem:[#allocation2 + $0x28] sm:$0xff]
    %v289 = vld [vmem:[#allocation2 + $0x30] sm:$0xff]
    %v290 = vld [vmem:[#allocation2 + $0x38] sm:$0xff]
    %v291 = vld [vmem:[#allocation2 + $0x40] sm:$0xff]
    %v292 = vld [vmem:[#allocation2 + $0x48] sm:$0xff]
    %v293 = vld [vmem:[#allocation2 + $0x50] sm:$0xff]
    %v294 = vld [vmem:[#allocation2 + $0x58] sm:$0xff]
    %v295 = vld [vmem:[#allocation2 + $0x60] sm:$0xff]
    %v296 = vld [vmem:[#allocation2 + $0x68] sm:$0xff]
    %v297 = vld [vmem:[#allocation2 + $0x70] sm:$0xff]
    %v298 = vld [vmem:[#allocation2 + $0x78] sm:$0xff]
    %v299 = vld [vmem:[#allocation2 + $0x80] sm:$0xff]
    %v300 = vld [vmem:[#allocation2 + $0x88] sm:$0xff]
    %v301 = vld [vmem:[#allocation2 + $0x90] sm:$0xff]
    %v302 = vld [vmem:[#allocation2 + $0x98] sm:$0xff]
    %v303 = vld [vmem:[#allocation2 + $0xa0] sm:$0xff]
    %v304 = vld [vmem:[#allocation2 + $0xa8] sm:$0xff]
    %v305 = vld [vmem:[#allocation2 + $0xb0] sm:$0xff]
    %v306 = vld [vmem:[#allocation2 + $0xb8] sm:$0xff]
    %v307 = vld [vmem:[#allocation2 + $0xc0] sm:$0xff]
    %v308 = vld [vmem:[#allocation2 + $0xc8] sm:$0xff]
    %v309 = vld [vmem:[#allocation2 + $0xd0] sm:$0xff]
    %v310 = vld [vmem:[#allocation2 + $0xd8] sm:$0xff]
    %v311 = vld [vmem:[#allocation2 + $0xe0] sm:$0xff]
    %v312 = vld [vmem:[#allocation2 + $0xe8] sm:$0xff]
    %v313 = vld [vmem:[#allocation2 + $0xf0] sm:$0xff]
    %v314 = vld [vmem:[#allocation2 + $0xf8] sm:$0xff]
    %v315 = vld [vmem:[#allocation2 + $0x100] sm:$0xff]
    %v316 = vld [vmem:[#allocation2 + $0x108] sm:$0xff]
    %v317 = vld [vmem:[#allocation2 + $0x110] sm:$0xff]
    %v318 = vld [vmem:[#allocation2 + $0x118] sm:$0xff]
    %v319 = vld [vmem:[#allocation2 + $0x120] sm:$0xff]
    %v320 = vld [vmem:[#allocation2 + $0x128] sm:$0xff]
    %v321 = vld [vmem:[#allocation2 + $0x130] sm:$0xff]
    %v322 = vld [vmem:[#allocation2 + $0x138] sm:$0xff]
    %v323 = vld [vmem:[#allocation2 + $0x140] sm:$0xff]
    %v324 = vld [vmem:[#allocation2 + $0x148] sm:$0xff]
    %v325 = vld [vmem:[#allocation2 + $0x150] sm:$0xff]
    %v326 = vld [vmem:[#allocation2 + $0x158] sm:$0xff]
    %v327 = vld [vmem:[#allocation2 + $0x160] sm:$0xff]
    %v328 = vld [vmem:[#allocation2 + $0x168] sm:$0xff]
    %v329 = vld [vmem:[#allocation2 + $0x170] sm:$0xff]
    %v330 = vld [vmem:[#allocation2 + $0x178] sm:$0xff]
    %v331 = vld [vmem:[#allocation2 + $0x180] sm:$0xff]
    %v332 = vld [vmem:[#allocation2 + $0x188] sm:$0xff]
    %v333 = vld [vmem:[#allocation2 + $0x190] sm:$0xff]
    %v334 = vld [vmem:[#allocation2 + $0x198] sm:$0xff]
    %v335 = vld [vmem:[#allocation2 + $0x1a0] sm:$0xff]
    %v336 = vld [vmem:[#allocation2 + $0x1a8] sm:$0xff]
    %v337 = vld [vmem:[#allocation2 + $0x1b0] sm:$0xff]
    %v338 = vld [vmem:[#allocation2 + $0x1b8] sm:$0xff]
    %v339 = vld [vmem:[#allocation2 + $0x1c0] sm:$0xff]
    %v340 = vld [vmem:[#allocation2 + $0x1c8] sm:$0xff]
    %v341 = vld [vmem:[#allocation2 + $0x1d0] sm:$0xff]
    %v342 = vld [vmem:[#allocation2 + $0x1d8] sm:$0xff]
    %v343 = vld [vmem:[#allocation2 + $0x1e0] sm:$0xff]
    %v344 = vld [vmem:[#allocation2 + $0x1e8] sm:$0xff]
    %v345 = vld [vmem:[#allocation2 + $0x1f0] sm:$0xff]
    %v346 = vld [vmem:[#allocation2 + $0x1f8] sm:$0xff]
    %347 = vmatpush.msra.mxu0 %v343
    %348 = vmatpush.msra.mxu0 %v339
    %349 = vmatpush.msra.mxu0 %v335
    %350 = vmatpush.msra.mxu0 %v331
    %351 = vmatpush.msra.mxu0 %v327
    %352 = vmatpush.msra.mxu0 %v323
    %353 = vmatpush.msra.mxu0 %v319
    %354 = vmatpush.msra.mxu0 %v315
    %355 = vmatpush.msra.mxu0 %v311
    %356 = vmatpush.msra.mxu0 %v307
    %357 = vmatpush.msra.mxu0 %v303
    %358 = vmatpush.msra.mxu0 %v299
    %359 = vmatpush.msra.mxu0 %v295
    %360 = vmatpush.msra.mxu0 %v291
    %361 = vmatpush.msra.mxu0 %v287
    %362 = vmatpush.msra.mxu0 %v283
    %363 = vmatmul.f32.gmra.mxu0 0.0
    %v364 = vpop.f32.mrf.mxu0
    %v365 = vadd.f32 0.0, %v364
    %366 = vdwg.mxu0
    %367 = vmatpush.msra.mxu0 %v344
    %368 = vmatpush.msra.mxu0 %v340
    %369 = vmatpush.msra.mxu0 %v336
    %370 = vmatpush.msra.mxu0 %v332
    %371 = vmatpush.msra.mxu0 %v328
    %372 = vmatpush.msra.mxu0 %v324
    %373 = vmatpush.msra.mxu0 %v320
    %374 = vmatpush.msra.mxu0 %v316
    %375 = vmatpush.msra.mxu0 %v312
    %376 = vmatpush.msra.mxu0 %v308
    %377 = vmatpush.msra.mxu0 %v304
    %378 = vmatpush.msra.mxu0 %v300
    %379 = vmatpush.msra.mxu0 %v296
    %380 = vmatpush.msra.mxu0 %v292
    %381 = vmatpush.msra.mxu0 %v288
    %382 = vmatpush.msra.mxu0 %v284
    %383 = vmatmul.f32.gmra.mxu0 0.0
    %v384 = vpop.f32.mrf.mxu0
    %v385 = vadd.f32 0.0, %v384
    %386 = vdwg.mxu0
    %387 = vmatpush.msra.mxu0 %v345
    %388 = vmatpush.msra.mxu0 %v341
    %389 = vmatpush.msra.mxu0 %v337
    %390 = vmatpush.msra.mxu0 %v333
    %391 = vmatpush.msra.mxu0 %v329
    %392 = vmatpush.msra.mxu0 %v325
    %393 = vmatpush.msra.mxu0 %v321
    %394 = vmatpush.msra.mxu0 %v317
    %395 = vmatpush.msra.mxu0 %v313
    %396 = vmatpush.msra.mxu0 %v309
    %397 = vmatpush.msra.mxu0 %v305
    %398 = vmatpush.msra.mxu0 %v301
    %399 = vmatpush.msra.mxu0 %v297
    %400 = vmatpush.msra.mxu0 %v293
    %401 = vmatpush.msra.mxu0 %v289
    %402 = vmatpush.msra.mxu0 %v285
    %403 = vmatmul.f32.gmra.mxu0 0.0
    %v404 = vpop.f32.mrf.mxu0
    %v405 = vadd.f32 0.0, %v404
    %406 = vdwg.mxu0
    %407 = vmatpush.msra.mxu0 %v346
    %408 = vmatpush.msra.mxu0 %v342
    %409 = vmatpush.msra.mxu0 %v338
    %410 = vmatpush.msra.mxu0 %v334
    %411 = vmatpush.msra.mxu0 %v330
    %412 = vmatpush.msra.mxu0 %v326
    %413 = vmatpush.msra.mxu0 %v322
    %414 = vmatpush.msra.mxu0 %v318
    %415 = vmatpush.msra.mxu0 %v314
    %416 = vmatpush.msra.mxu0 %v310
    %417 = vmatpush.msra.mxu0 %v306
    %418 = vmatpush.msra.mxu0 %v302
    %419 = vmatpush.msra.mxu0 %v298
    %420 = vmatpush.msra.mxu0 %v294
    %421 = vmatpush.msra.mxu0 %v290
    %422 = vmatpush.msra.mxu0 %v286
    %423 = vmatmul.f32.gmra.mxu0 0.0
    %v424 = vpop.f32.mrf.mxu0
    %v425 = vadd.f32 0.0, %v424
    %426 = vdwg.mxu0
    %v427 = vadd.f32 %v137, %v365
    %v428 = vadd.f32 %v178, %v385
    %v429 = vadd.f32 %v219, %v405
    %v430 = vadd.f32 %v260, %v425
    %v431 = vxor.u32 %v427, 2147483648
    %v432 = vmul.f32 %v431, 1.442695
    %v433 = vpow.pop %v432
    %v434 = vadd.f32 %v433, 1.0
    %v435 = vrcp.pop %v434
    %v436 = vmul.f32 %v434, %v435
    %v437 = vsub.f32 1.0, %v436
    %v438 = vmul.f32 %v435, %v437
    %v439 = vadd.f32 %v435, %v438
    %vm440 = vweird.f32 %v434
    %vm441 = vweird.f32 %v435
    %vm442 = vmor %vm440, %vm441
    %v443 = vsel %vm442, %v435, %v439
    %v444 = vand.u32 2147483647, %v434
    %vm445 = vcmp.eq.f32.partialorder %v444, 8.507059e+37
    %v446 = vand.u32 %v434, 2147483648
    %v447 = vor.u32 1.1754944e-38, %v446
    %v448 = vsel %vm445, %v447, %v443
    %v449 = vmul.f32 1.0, %v448
    %v450 = vxor.u32 %v428, 2147483648
    %v451 = vmul.f32 %v450, 1.442695
    %v452 = vpow.pop %v451
    %v453 = vadd.f32 %v452, 1.0
    %v454 = vrcp.pop %v453
    %v455 = vmul.f32 %v453, %v454
    %v456 = vsub.f32 1.0, %v455
    %v457 = vmul.f32 %v454, %v456
    %v458 = vadd.f32 %v454, %v457
    %vm459 = vweird.f32 %v453
    %vm460 = vweird.f32 %v454
    %vm461 = vmor %vm459, %vm460
    %v462 = vsel %vm461, %v454, %v458
    %v463 = vand.u32 2147483647, %v453
    %vm464 = vcmp.eq.f32.partialorder %v463, 8.507059e+37
    %v465 = vand.u32 %v453, 2147483648
    %v466 = vor.u32 1.1754944e-38, %v465
    %v467 = vsel %vm464, %v466, %v462
    %v468 = vmul.f32 1.0, %v467
    %v469 = vtanh.pop %v429
    %v470 = vxor.u32 %v430, 2147483648
    %v471 = vmul.f32 %v470, 1.442695
    %v472 = vpow.pop %v471
    %v473 = vadd.f32 %v472, 1.0
    %v474 = vrcp.pop %v473
    %v475 = vmul.f32 %v473, %v474
    %v476 = vsub.f32 1.0, %v475
    %v477 = vmul.f32 %v474, %v476
    %v478 = vadd.f32 %v474, %v477
    %vm479 = vweird.f32 %v473
    %vm480 = vweird.f32 %v474
    %vm481 = vmor %vm479, %vm480
    %v482 = vsel %vm481, %v474, %v478
    %v483 = vand.u32 2147483647, %v473
    %vm484 = vcmp.eq.f32.partialorder %v483, 8.507059e+37
    %v485 = vand.u32 %v473, 2147483648
    %v486 = vor.u32 1.1754944e-38, %v485
    %v487 = vsel %vm484, %v486, %v482
    %v488 = vmul.f32 1.0, %v487
    %v489 = vmul.f32 %v468, 0.0
    %v490 = vmul.f32 %v449, %v469
    %v491 = vadd.f32 %v489, %v490
    %v492 = vtanh.pop %v491
    %v493 = vmul.f32 %v488, %v492
    %494 = vmatpush.msra.mxu0 %v343
    %495 = vmatpush.msra.mxu0 %v339
    %496 = vmatpush.msra.mxu0 %v335
    %497 = vmatpush.msra.mxu0 %v331
    %498 = vmatpush.msra.mxu0 %v327
    %499 = vmatpush.msra.mxu0 %v323
    %500 = vmatpush.msra.mxu0 %v319
    %501 = vmatpush.msra.mxu0 %v315
    %502 = vmatpush.msra.mxu0 %v311
    %503 = vmatpush.msra.mxu0 %v307
    %504 = vmatpush.msra.mxu0 %v303
    %505 = vmatpush.msra.mxu0 %v299
    %506 = vmatpush.msra.mxu0 %v295
    %507 = vmatpush.msra.mxu0 %v291
    %508 = vmatpush.msra.mxu0 %v287
    %509 = vmatpush.msra.mxu0 %v283
    %510 = vmatmul.f32.gmra.mxu0 %v493
    %v511 = vpop.f32.mrf.mxu0
    %v512 = vadd.f32 0.0, %v511
    %513 = vdwg.mxu0
    %514 = vmatpush.msra.mxu0 %v344
    %515 = vmatpush.msra.mxu0 %v340
    %516 = vmatpush.msra.mxu0 %v336
    %517 = vmatpush.msra.mxu0 %v332
    %518 = vmatpush.msra.mxu0 %v328
    %519 = vmatpush.msra.mxu0 %v324
    %520 = vmatpush.msra.mxu0 %v320
    %521 = vmatpush.msra.mxu0 %v316
    %522 = vmatpush.msra.mxu0 %v312
    %523 = vmatpush.msra.mxu0 %v308
    %524 = vmatpush.msra.mxu0 %v304
    %525 = vmatpush.msra.mxu0 %v300
    %526 = vmatpush.msra.mxu0 %v296
    %527 = vmatpush.msra.mxu0 %v292
    %528 = vmatpush.msra.mxu0 %v288
    %529 = vmatpush.msra.mxu0 %v284
    %530 = vmatmul.f32.gmra.mxu0 %v493
    %v531 = vpop.f32.mrf.mxu0
    %v532 = vadd.f32 0.0, %v531
    %533 = vdwg.mxu0
    %534 = vmatpush.msra.mxu0 %v345
    %535 = vmatpush.msra.mxu0 %v341
    %536 = vmatpush.msra.mxu0 %v337
    %537 = vmatpush.msra.mxu0 %v333
    %538 = vmatpush.msra.mxu0 %v329
    %539 = vmatpush.msra.mxu0 %v325
    %540 = vmatpush.msra.mxu0 %v321
    %541 = vmatpush.msra.mxu0 %v317
    %542 = vmatpush.msra.mxu0 %v313
    %543 = vmatpush.msra.mxu0 %v309
    %544 = vmatpush.msra.mxu0 %v305
    %545 = vmatpush.msra.mxu0 %v301
    %546 = vmatpush.msra.mxu0 %v297
    %547 = vmatpush.msra.mxu0 %v293
    %548 = vmatpush.msra.mxu0 %v289
    %549 = vmatpush.msra.mxu0 %v285
    %550 = vmatmul.f32.gmra.mxu0 %v493
    %v551 = vpop.f32.mrf.mxu0
    %v552 = vadd.f32 0.0, %v551
    %553 = vdwg.mxu0
    %554 = vmatpush.msra.mxu0 %v346
    %555 = vmatpush.msra.mxu0 %v342
    %556 = vmatpush.msra.mxu0 %v338
    %557 = vmatpush.msra.mxu0 %v334
    %558 = vmatpush.msra.mxu0 %v330
    %559 = vmatpush.msra.mxu0 %v326
    %560 = vmatpush.msra.mxu0 %v322
    %561 = vmatpush.msra.mxu0 %v318
    %562 = vmatpush.msra.mxu0 %v314
    %563 = vmatpush.msra.mxu0 %v310
    %564 = vmatpush.msra.mxu0 %v306
    %565 = vmatpush.msra.mxu0 %v302
    %566 = vmatpush.msra.mxu0 %v298
    %567 = vmatpush.msra.mxu0 %v294
    %568 = vmatpush.msra.mxu0 %v290
    %569 = vmatpush.msra.mxu0 %v286
    %570 = vmatmul.f32.gmra.mxu0 %v493
    %v571 = vpop.f32.mrf.mxu0
    %v572 = vadd.f32 0.0, %v571
    %573 = vdwg.mxu0
    %v574 = vadd.f32 %v140, %v512
    %v575 = vadd.f32 %v181, %v532
    %v576 = vadd.f32 %v222, %v552
    %v577 = vadd.f32 %v263, %v572
    %v578 = vxor.u32 %v574, 2147483648
    %v579 = vmul.f32 %v578, 1.442695
    %v580 = vpow.pop %v579
    %v581 = vadd.f32 %v580, 1.0
    %v582 = vrcp.pop %v581
    %v583 = vmul.f32 %v581, %v582
    %v584 = vsub.f32 1.0, %v583
    %v585 = vmul.f32 %v582, %v584
    %v586 = vadd.f32 %v582, %v585
    %vm587 = vweird.f32 %v581
    %vm588 = vweird.f32 %v582
    %vm589 = vmor %vm587, %vm588
    %v590 = vsel %vm589, %v582, %v586
    %v591 = vand.u32 2147483647, %v581
    %vm592 = vcmp.eq.f32.partialorder %v591, 8.507059e+37
    %v593 = vand.u32 %v581, 2147483648
    %v594 = vor.u32 1.1754944e-38, %v593
    %v595 = vsel %vm592, %v594, %v590
    %v596 = vmul.f32 1.0, %v595
    %v597 = vxor.u32 %v575, 2147483648
    %v598 = vmul.f32 %v597, 1.442695
    %v599 = vpow.pop %v598
    %v600 = vadd.f32 %v599, 1.0
    %v601 = vrcp.pop %v600
    %v602 = vmul.f32 %v600, %v601
    %v603 = vsub.f32 1.0, %v602
    %v604 = vmul.f32 %v601, %v603
    %v605 = vadd.f32 %v601, %v604
    %vm606 = vweird.f32 %v600
    %vm607 = vweird.f32 %v601
    %vm608 = vmor %vm606, %vm607
    %v609 = vsel %vm608, %v601, %v605
    %v610 = vand.u32 2147483647, %v600
    %vm611 = vcmp.eq.f32.partialorder %v610, 8.507059e+37
    %v612 = vand.u32 %v600, 2147483648
    %v613 = vor.u32 1.1754944e-38, %v612
    %v614 = vsel %vm611, %v613, %v609
    %v615 = vmul.f32 1.0, %v614
    %v616 = vtanh.pop %v576
    %v617 = vxor.u32 %v577, 2147483648
    %v618 = vmul.f32 %v617, 1.442695
    %v619 = vpow.pop %v618
    %v620 = vadd.f32 %v619, 1.0
    %v621 = vrcp.pop %v620
    %v622 = vmul.f32 %v620, %v621
    %v623 = vsub.f32 1.0, %v622
    %v624 = vmul.f32 %v621, %v623
    %v625 = vadd.f32 %v621, %v624
    %vm626 = vweird.f32 %v620
    %vm627 = vweird.f32 %v621
    %vm628 = vmor %vm626, %vm627
    %v629 = vsel %vm628, %v621, %v625
    %v630 = vand.u32 2147483647, %v620
    %vm631 = vcmp.eq.f32.partialorder %v630, 8.507059e+37
    %v632 = vand.u32 %v620, 2147483648
    %v633 = vor.u32 1.1754944e-38, %v632
    %v634 = vsel %vm631, %v633, %v629
    %v635 = vmul.f32 1.0, %v634
    %v636 = vmul.f32 %v615, %v491
    %v637 = vmul.f32 %v596, %v616
    %v638 = vadd.f32 %v636, %v637
    %v639 = vtanh.pop %v638
    %v640 = vmul.f32 %v635, %v639
    %641 = vmatpush.msra.mxu0 %v343
    %642 = vmatpush.msra.mxu0 %v339
    %643 = vmatpush.msra.mxu0 %v335
    %644 = vmatpush.msra.mxu0 %v331
    %645 = vmatpush.msra.mxu0 %v327
    %646 = vmatpush.msra.mxu0 %v323
    %647 = vmatpush.msra.mxu0 %v319
    %648 = vmatpush.msra.mxu0 %v315
    %649 = vmatpush.msra.mxu0 %v311
    %650 = vmatpush.msra.mxu0 %v307
    %651 = vmatpush.msra.mxu0 %v303
    %652 = vmatpush.msra.mxu0 %v299
    %653 = vmatpush.msra.mxu0 %v295
    %654 = vmatpush.msra.mxu0 %v291
    %655 = vmatpush.msra.mxu0 %v287
    %656 = vmatpush.msra.mxu0 %v283
    %657 = vmatmul.f32.gmra.mxu0 %v640
    %v658 = vpop.f32.mrf.mxu0
    %v659 = vadd.f32 0.0, %v658
    %660 = vdwg.mxu0
    %661 = vmatpush.msra.mxu0 %v344
    %662 = vmatpush.msra.mxu0 %v340
    %663 = vmatpush.msra.mxu0 %v336
    %664 = vmatpush.msra.mxu0 %v332
    %665 = vmatpush.msra.mxu0 %v328
    %666 = vmatpush.msra.mxu0 %v324
    %667 = vmatpush.msra.mxu0 %v320
    %668 = vmatpush.msra.mxu0 %v316
    %669 = vmatpush.msra.mxu0 %v312
    %670 = vmatpush.msra.mxu0 %v308
    %671 = vmatpush.msra.mxu0 %v304
    %672 = vmatpush.msra.mxu0 %v300
    %673 = vmatpush.msra.mxu0 %v296
    %674 = vmatpush.msra.mxu0 %v292
    %675 = vmatpush.msra.mxu0 %v288
    %676 = vmatpush.msra.mxu0 %v284
    %677 = vmatmul.f32.gmra.mxu0 %v640
    %v678 = vpop.f32.mrf.mxu0
    %v679 = vadd.f32 0.0, %v678
    %680 = vdwg.mxu0
    %681 = vmatpush.msra.mxu0 %v345
    %682 = vmatpush.msra.mxu0 %v341
    %683 = vmatpush.msra.mxu0 %v337
    %684 = vmatpush.msra.mxu0 %v333
    %685 = vmatpush.msra.mxu0 %v329
    %686 = vmatpush.msra.mxu0 %v325
    %687 = vmatpush.msra.mxu0 %v321
    %688 = vmatpush.msra.mxu0 %v317
    %689 = vmatpush.msra.mxu0 %v313
    %690 = vmatpush.msra.mxu0 %v309
    %691 = vmatpush.msra.mxu0 %v305
    %692 = vmatpush.msra.mxu0 %v301
    %693 = vmatpush.msra.mxu0 %v297
    %694 = vmatpush.msra.mxu0 %v293
    %695 = vmatpush.msra.mxu0 %v289
    %696 = vmatpush.msra.mxu0 %v285
    %697 = vmatmul.f32.gmra.mxu0 %v640
    %v698 = vpop.f32.mrf.mxu0
    %v699 = vadd.f32 0.0, %v698
    %700 = vdwg.mxu0
    %701 = vmatpush.msra.mxu0 %v346
    %702 = vmatpush.msra.mxu0 %v342
    %703 = vmatpush.msra.mxu0 %v338
    %704 = vmatpush.msra.mxu0 %v334
    %705 = vmatpush.msra.mxu0 %v330
    %706 = vmatpush.msra.mxu0 %v326
    %707 = vmatpush.msra.mxu0 %v322
    %708 = vmatpush.msra.mxu0 %v318
    %709 = vmatpush.msra.mxu0 %v314
    %710 = vmatpush.msra.mxu0 %v310
    %711 = vmatpush.msra.mxu0 %v306
    %712 = vmatpush.msra.mxu0 %v302
    %713 = vmatpush.msra.mxu0 %v298
    %714 = vmatpush.msra.mxu0 %v294
    %715 = vmatpush.msra.mxu0 %v290
    %716 = vmatpush.msra.mxu0 %v286
    %717 = vmatmul.f32.gmra.mxu0 %v640
    %v718 = vpop.f32.mrf.mxu0
    %v719 = vadd.f32 0.0, %v718
    %720 = vdwg.mxu0
    %v721 = vadd.f32 %v143, %v659
    %v722 = vadd.f32 %v184, %v679
    %v723 = vadd.f32 %v225, %v699
    %v724 = vadd.f32 %v266, %v719
    %v725 = vxor.u32 %v721, 2147483648
    %v726 = vmul.f32 %v725, 1.442695
    %v727 = vpow.pop %v726
    %v728 = vadd.f32 %v727, 1.0
    %v729 = vrcp.pop %v728
    %v730 = vmul.f32 %v728, %v729
    %v731 = vsub.f32 1.0, %v730
    %v732 = vmul.f32 %v729, %v731
    %v733 = vadd.f32 %v729, %v732
    %vm734 = vweird.f32 %v728
    %vm735 = vweird.f32 %v729
    %vm736 = vmor %vm734, %vm735
    %v737 = vsel %vm736, %v729, %v733
    %v738 = vand.u32 2147483647, %v728
    %vm739 = vcmp.eq.f32.partialorder %v738, 8.507059e+37
    %v740 = vand.u32 %v728, 2147483648
    %v741 = vor.u32 1.1754944e-38, %v740
    %v742 = vsel %vm739, %v741, %v737
    %v743 = vmul.f32 1.0, %v742
    %v744 = vxor.u32 %v722, 2147483648
    %v745 = vmul.f32 %v744, 1.442695
    %v746 = vpow.pop %v745
    %v747 = vadd.f32 %v746, 1.0
    %v748 = vrcp.pop %v747
    %v749 = vmul.f32 %v747, %v748
    %v750 = vsub.f32 1.0, %v749
    %v751 = vmul.f32 %v748, %v750
    %v752 = vadd.f32 %v748, %v751
    %vm753 = vweird.f32 %v747
    %vm754 = vweird.f32 %v748
    %vm755 = vmor %vm753, %vm754
    %v756 = vsel %vm755, %v748, %v752
    %v757 = vand.u32 2147483647, %v747
    %vm758 = vcmp.eq.f32.partialorder %v757, 8.507059e+37
    %v759 = vand.u32 %v747, 2147483648
    %v760 = vor.u32 1.1754944e-38, %v759
    %v761 = vsel %vm758, %v760, %v756
    %v762 = vmul.f32 1.0, %v761
    %v763 = vtanh.pop %v723
    %v764 = vxor.u32 %v724, 2147483648
    %v765 = vmul.f32 %v764, 1.442695
    %v766 = vpow.pop %v765
    %v767 = vadd.f32 %v766, 1.0
    %v768 = vrcp.pop %v767
    %v769 = vmul.f32 %v767, %v768
    %v770 = vsub.f32 1.0, %v769
    %v771 = vmul.f32 %v768, %v770
    %v772 = vadd.f32 %v768, %v771
    %vm773 = vweird.f32 %v767
    %vm774 = vweird.f32 %v768
    %vm775 = vmor %vm773, %vm774
    %v776 = vsel %vm775, %v768, %v772
    %v777 = vand.u32 2147483647, %v767
    %vm778 = vcmp.eq.f32.partialorder %v777, 8.507059e+37
    %v779 = vand.u32 %v767, 2147483648
    %v780 = vor.u32 1.1754944e-38, %v779
    %v781 = vsel %vm778, %v780, %v776
    %v782 = vmul.f32 1.0, %v781
    %v783 = vmul.f32 %v762, %v638
    %v784 = vmul.f32 %v743, %v763
    %v785 = vadd.f32 %v783, %v784
    %v786 = vtanh.pop %v785
    %v787 = vmul.f32 %v782, %v786
    %788 = vmatpush.msra.mxu0 %v343
    %789 = vmatpush.msra.mxu0 %v339
    %790 = vmatpush.msra.mxu0 %v335
    %791 = vmatpush.msra.mxu0 %v331
    %792 = vmatpush.msra.mxu0 %v327
    %793 = vmatpush.msra.mxu0 %v323
    %794 = vmatpush.msra.mxu0 %v319
    %795 = vmatpush.msra.mxu0 %v315
    %796 = vmatpush.msra.mxu0 %v311
    %797 = vmatpush.msra.mxu0 %v307
    %798 = vmatpush.msra.mxu0 %v303
    %799 = vmatpush.msra.mxu0 %v299
    %800 = vmatpush.msra.mxu0 %v295
    %801 = vmatpush.msra.mxu0 %v291
    %802 = vmatpush.msra.mxu0 %v287
    %803 = vmatpush.msra.mxu0 %v283
    %804 = vmatmul.f32.gmra.mxu0 %v787
    %v805 = vpop.f32.mrf.mxu0
    %v806 = vadd.f32 0.0, %v805
    %807 = vdwg.mxu0
    %808 = vmatpush.msra.mxu0 %v344
    %809 = vmatpush.msra.mxu0 %v340
    %810 = vmatpush.msra.mxu0 %v336
    %811 = vmatpush.msra.mxu0 %v332
    %812 = vmatpush.msra.mxu0 %v328
    %813 = vmatpush.msra.mxu0 %v324
    %814 = vmatpush.msra.mxu0 %v320
    %815 = vmatpush.msra.mxu0 %v316
    %816 = vmatpush.msra.mxu0 %v312
    %817 = vmatpush.msra.mxu0 %v308
    %818 = vmatpush.msra.mxu0 %v304
    %819 = vmatpush.msra.mxu0 %v300
    %820 = vmatpush.msra.mxu0 %v296
    %821 = vmatpush.msra.mxu0 %v292
    %822 = vmatpush.msra.mxu0 %v288
    %823 = vmatpush.msra.mxu0 %v284
    %824 = vmatmul.f32.gmra.mxu0 %v787
    %v825 = vpop.f32.mrf.mxu0
    %v826 = vadd.f32 0.0, %v825
    %827 = vdwg.mxu0
    %828 = vmatpush.msra.mxu0 %v345
    %829 = vmatpush.msra.mxu0 %v341
    %830 = vmatpush.msra.mxu0 %v337
    %831 = vmatpush.msra.mxu0 %v333
    %832 = vmatpush.msra.mxu0 %v329
    %833 = vmatpush.msra.mxu0 %v325
    %834 = vmatpush.msra.mxu0 %v321
    %835 = vmatpush.msra.mxu0 %v317
    %836 = vmatpush.msra.mxu0 %v313
    %837 = vmatpush.msra.mxu0 %v309
    %838 = vmatpush.msra.mxu0 %v305
    %839 = vmatpush.msra.mxu0 %v301
    %840 = vmatpush.msra.mxu0 %v297
    %841 = vmatpush.msra.mxu0 %v293
    %842 = vmatpush.msra.mxu0 %v289
    %843 = vmatpush.msra.mxu0 %v285
    %844 = vmatmul.f32.gmra.mxu0 %v787
    %v845 = vpop.f32.mrf.mxu0
    %v846 = vadd.f32 0.0, %v845
    %847 = vdwg.mxu0
    %848 = vmatpush.msra.mxu0 %v346
    %849 = vmatpush.msra.mxu0 %v342
    %850 = vmatpush.msra.mxu0 %v338
    %851 = vmatpush.msra.mxu0 %v334
    %852 = vmatpush.msra.mxu0 %v330
    %853 = vmatpush.msra.mxu0 %v326
    %854 = vmatpush.msra.mxu0 %v322
    %855 = vmatpush.msra.mxu0 %v318
    %856 = vmatpush.msra.mxu0 %v314
    %857 = vmatpush.msra.mxu0 %v310
    %858 = vmatpush.msra.mxu0 %v306
    %859 = vmatpush.msra.mxu0 %v302
    %860 = vmatpush.msra.mxu0 %v298
    %861 = vmatpush.msra.mxu0 %v294
    %862 = vmatpush.msra.mxu0 %v290
    %863 = vmatpush.msra.mxu0 %v286
    %864 = vmatmul.f32.gmra.mxu0 %v787
    %v865 = vpop.f32.mrf.mxu0
    %v866 = vadd.f32 0.0, %v865
    %867 = vdwg.mxu0
    %v868 = vadd.f32 %v146, %v806
    %v869 = vadd.f32 %v187, %v826
    %v870 = vadd.f32 %v228, %v846
    %v871 = vadd.f32 %v269, %v866
    %v872 = vxor.u32 %v868, 2147483648
    %v873 = vmul.f32 %v872, 1.442695
    %v874 = vpow.pop %v873
    %v875 = vadd.f32 %v874, 1.0
    %v876 = vrcp.pop %v875
    %v877 = vmul.f32 %v875, %v876
    %v878 = vsub.f32 1.0, %v877
    %v879 = vmul.f32 %v876, %v878
    %v880 = vadd.f32 %v876, %v879
    %vm881 = vweird.f32 %v875
    %vm882 = vweird.f32 %v876
    %vm883 = vmor %vm881, %vm882
    %v884 = vsel %vm883, %v876, %v880
    %v885 = vand.u32 2147483647, %v875
    %vm886 = vcmp.eq.f32.partialorder %v885, 8.507059e+37
    %v887 = vand.u32 %v875, 2147483648
    %v888 = vor.u32 1.1754944e-38, %v887
    %v889 = vsel %vm886, %v888, %v884
    %v890 = vmul.f32 1.0, %v889
    %v891 = vxor.u32 %v869, 2147483648
    %v892 = vmul.f32 %v891, 1.442695
    %v893 = vpow.pop %v892
    %v894 = vadd.f32 %v893, 1.0
    %v895 = vrcp.pop %v894
    %v896 = vmul.f32 %v894, %v895
    %v897 = vsub.f32 1.0, %v896
    %v898 = vmul.f32 %v895, %v897
    %v899 = vadd.f32 %v895, %v898
    %vm900 = vweird.f32 %v894
    %vm901 = vweird.f32 %v895
    %vm902 = vmor %vm900, %vm901
    %v903 = vsel %vm902, %v895, %v899
    %v904 = vand.u32 2147483647, %v894
    %vm905 = vcmp.eq.f32.partialorder %v904, 8.507059e+37
    %v906 = vand.u32 %v894, 2147483648
    %v907 = vor.u32 1.1754944e-38, %v906
    %v908 = vsel %vm905, %v907, %v903
    %v909 = vmul.f32 1.0, %v908
    %v910 = vtanh.pop %v870
    %v911 = vxor.u32 %v871, 2147483648
    %v912 = vmul.f32 %v911, 1.442695
    %v913 = vpow.pop %v912
    %v914 = vadd.f32 %v913, 1.0
    %v915 = vrcp.pop %v914
    %v916 = vmul.f32 %v914, %v915
    %v917 = vsub.f32 1.0, %v916
    %v918 = vmul.f32 %v915, %v917
    %v919 = vadd.f32 %v915, %v918
    %vm920 = vweird.f32 %v914
    %vm921 = vweird.f32 %v915
    %vm922 = vmor %vm920, %vm921
    %v923 = vsel %vm922, %v915, %v919
    %v924 = vand.u32 2147483647, %v914
    %vm925 = vcmp.eq.f32.partialorder %v924, 8.507059e+37
    %v926 = vand.u32 %v914, 2147483648
    %v927 = vor.u32 1.1754944e-38, %v926
    %v928 = vsel %vm925, %v927, %v923
    %v929 = vmul.f32 1.0, %v928
    %v930 = vmul.f32 %v909, %v785
    %v931 = vmul.f32 %v890, %v910
    %v932 = vadd.f32 %v930, %v931
    %v933 = vtanh.pop %v932
    %v934 = vmul.f32 %v929, %v933
    %935 = vmatpush.msra.mxu0 %v343
    %936 = vmatpush.msra.mxu0 %v339
    %937 = vmatpush.msra.mxu0 %v335
    %938 = vmatpush.msra.mxu0 %v331
    %939 = vmatpush.msra.mxu0 %v327
    %940 = vmatpush.msra.mxu0 %v323
    %941 = vmatpush.msra.mxu0 %v319
    %942 = vmatpush.msra.mxu0 %v315
    %943 = vmatpush.msra.mxu0 %v311
    %944 = vmatpush.msra.mxu0 %v307
    %945 = vmatpush.msra.mxu0 %v303
    %946 = vmatpush.msra.mxu0 %v299
    %947 = vmatpush.msra.mxu0 %v295
    %948 = vmatpush.msra.mxu0 %v291
    %949 = vmatpush.msra.mxu0 %v287
    %950 = vmatpush.msra.mxu0 %v283
    %951 = vmatmul.f32.gmra.mxu0 %v934
    %v952 = vpop.f32.mrf.mxu0
    %v953 = vadd.f32 0.0, %v952
    %954 = vdwg.mxu0
    %955 = vmatpush.msra.mxu0 %v344
    %956 = vmatpush.msra.mxu0 %v340
    %957 = vmatpush.msra.mxu0 %v336
    %958 = vmatpush.msra.mxu0 %v332
    %959 = vmatpush.msra.mxu0 %v328
    %960 = vmatpush.msra.mxu0 %v324
    %961 = vmatpush.msra.mxu0 %v320
    %962 = vmatpush.msra.mxu0 %v316
    %963 = vmatpush.msra.mxu0 %v312
    %964 = vmatpush.msra.mxu0 %v308
    %965 = vmatpush.msra.mxu0 %v304
    %966 = vmatpush.msra.mxu0 %v300
    %967 = vmatpush.msra.mxu0 %v296
    %968 = vmatpush.msra.mxu0 %v292
    %969 = vmatpush.msra.mxu0 %v288
    %970 = vmatpush.msra.mxu0 %v284
    %971 = vmatmul.f32.gmra.mxu0 %v934
    %v972 = vpop.f32.mrf.mxu0
    %v973 = vadd.f32 0.0, %v972
    %974 = vdwg.mxu0
    %975 = vmatpush.msra.mxu0 %v345
    %976 = vmatpush.msra.mxu0 %v341
    %977 = vmatpush.msra.mxu0 %v337
    %978 = vmatpush.msra.mxu0 %v333
    %979 = vmatpush.msra.mxu0 %v329
    %980 = vmatpush.msra.mxu0 %v325
    %981 = vmatpush.msra.mxu0 %v321
    %982 = vmatpush.msra.mxu0 %v317
    %983 = vmatpush.msra.mxu0 %v313
    %984 = vmatpush.msra.mxu0 %v309
    %985 = vmatpush.msra.mxu0 %v305
    %986 = vmatpush.msra.mxu0 %v301
    %987 = vmatpush.msra.mxu0 %v297
    %988 = vmatpush.msra.mxu0 %v293
    %989 = vmatpush.msra.mxu0 %v289
    %990 = vmatpush.msra.mxu0 %v285
    %991 = vmatmul.f32.gmra.mxu0 %v934
    %v992 = vpop.f32.mrf.mxu0
    %v993 = vadd.f32 0.0, %v992
    %994 = vdwg.mxu0
    %995 = vmatpush.msra.mxu0 %v346
    %996 = vmatpush.msra.mxu0 %v342
    %997 = vmatpush.msra.mxu0 %v338
    %998 = vmatpush.msra.mxu0 %v334
    %999 = vmatpush.msra.mxu0 %v330
    %1000 = vmatpush.msra.mxu0 %v326
    %1001 = vmatpush.msra.mxu0 %v322
    %1002 = vmatpush.msra.mxu0 %v318
    %1003 = vmatpush.msra.mxu0 %v314
    %1004 = vmatpush.msra.mxu0 %v310
    %1005 = vmatpush.msra.mxu0 %v306
    %1006 = vmatpush.msra.mxu0 %v302
    %1007 = vmatpush.msra.mxu0 %v298
    %1008 = vmatpush.msra.mxu0 %v294
    %1009 = vmatpush.msra.mxu0 %v290
    %1010 = vmatpush.msra.mxu0 %v286
    %1011 = vmatmul.f32.gmra.mxu0 %v934
    %v1012 = vpop.f32.mrf.mxu0
    %v1013 = vadd.f32 0.0, %v1012
    %1014 = vdwg.mxu0
    %v1015 = vadd.f32 %v149, %v953
    %v1016 = vadd.f32 %v190, %v973
    %v1017 = vadd.f32 %v231, %v993
    %v1018 = vadd.f32 %v272, %v1013
    %v1019 = vxor.u32 %v1015, 2147483648
    %v1020 = vmul.f32 %v1019, 1.442695
    %v1021 = vpow.pop %v1020
    %v1022 = vadd.f32 %v1021, 1.0
    %v1023 = vrcp.pop %v1022
    %v1024 = vmul.f32 %v1022, %v1023
    %v1025 = vsub.f32 1.0, %v1024
    %v1026 = vmul.f32 %v1023, %v1025
    %v1027 = vadd.f32 %v1023, %v1026
    %vm1028 = vweird.f32 %v1022
    %vm1029 = vweird.f32 %v1023
    %vm1030 = vmor %vm1028, %vm1029
    %v1031 = vsel %vm1030, %v1023, %v1027
    %v1032 = vand.u32 2147483647, %v1022
    %vm1033 = vcmp.eq.f32.partialorder %v1032, 8.507059e+37
    %v1034 = vand.u32 %v1022, 2147483648
    %v1035 = vor.u32 1.1754944e-38, %v1034
    %v1036 = vsel %vm1033, %v1035, %v1031
    %v1037 = vmul.f32 1.0, %v1036
    %v1038 = vxor.u32 %v1016, 2147483648
    %v1039 = vmul.f32 %v1038, 1.442695
    %v1040 = vpow.pop %v1039
    %v1041 = vadd.f32 %v1040, 1.0
    %v1042 = vrcp.pop %v1041
    %v1043 = vmul.f32 %v1041, %v1042
    %v1044 = vsub.f32 1.0, %v1043
    %v1045 = vmul.f32 %v1042, %v1044
    %v1046 = vadd.f32 %v1042, %v1045
    %vm1047 = vweird.f32 %v1041
    %vm1048 = vweird.f32 %v1042
    %vm1049 = vmor %vm1047, %vm1048
    %v1050 = vsel %vm1049, %v1042, %v1046
    %v1051 = vand.u32 2147483647, %v1041
    %vm1052 = vcmp.eq.f32.partialorder %v1051, 8.507059e+37
    %v1053 = vand.u32 %v1041, 2147483648
    %v1054 = vor.u32 1.1754944e-38, %v1053
    %v1055 = vsel %vm1052, %v1054, %v1050
    %v1056 = vmul.f32 1.0, %v1055
    %v1057 = vtanh.pop %v1017
    %v1058 = vxor.u32 %v1018, 2147483648
    %v1059 = vmul.f32 %v1058, 1.442695
    %v1060 = vpow.pop %v1059
    %v1061 = vadd.f32 %v1060, 1.0
    %v1062 = vrcp.pop %v1061
    %v1063 = vmul.f32 %v1061, %v1062
    %v1064 = vsub.f32 1.0, %v1063
    %v1065 = vmul.f32 %v1062, %v1064
    %v1066 = vadd.f32 %v1062, %v1065
    %vm1067 = vweird.f32 %v1061
    %vm1068 = vweird.f32 %v1062
    %vm1069 = vmor %vm1067, %vm1068
    %v1070 = vsel %vm1069, %v1062, %v1066
    %v1071 = vand.u32 2147483647, %v1061
    %vm1072 = vcmp.eq.f32.partialorder %v1071, 8.507059e+37
    %v1073 = vand.u32 %v1061, 2147483648
    %v1074 = vor.u32 1.1754944e-38, %v1073
    %v1075 = vsel %vm1072, %v1074, %v1070
    %v1076 = vmul.f32 1.0, %v1075
    %v1077 = vmul.f32 %v1056, %v932
    %v1078 = vmul.f32 %v1037, %v1057
    %v1079 = vadd.f32 %v1077, %v1078
    %v1080 = vtanh.pop %v1079
    %v1081 = vmul.f32 %v1076, %v1080
    %1082 = vmatpush.msra.mxu0 %v343
    %1083 = vmatpush.msra.mxu0 %v339
    %1084 = vmatpush.msra.mxu0 %v335
    %1085 = vmatpush.msra.mxu0 %v331
    %1086 = vmatpush.msra.mxu0 %v327
    %1087 = vmatpush.msra.mxu0 %v323
    %1088 = vmatpush.msra.mxu0 %v319
    %1089 = vmatpush.msra.mxu0 %v315
    %1090 = vmatpush.msra.mxu0 %v311
    %1091 = vmatpush.msra.mxu0 %v307
    %1092 = vmatpush.msra.mxu0 %v303
    %1093 = vmatpush.msra.mxu0 %v299
    %1094 = vmatpush.msra.mxu0 %v295
    %1095 = vmatpush.msra.mxu0 %v291
    %1096 = vmatpush.msra.mxu0 %v287
    %1097 = vmatpush.msra.mxu0 %v283
    %1098 = vmatmul.f32.gmra.mxu0 %v1081
    %v1099 = vpop.f32.mrf.mxu0
    %v1100 = vadd.f32 0.0, %v1099
    %1101 = vdwg.mxu0
    %1102 = vmatpush.msra.mxu0 %v344
    %1103 = vmatpush.msra.mxu0 %v340
    %1104 = vmatpush.msra.mxu0 %v336
    %1105 = vmatpush.msra.mxu0 %v332
    %1106 = vmatpush.msra.mxu0 %v328
    %1107 = vmatpush.msra.mxu0 %v324
    %1108 = vmatpush.msra.mxu0 %v320
    %1109 = vmatpush.msra.mxu0 %v316
    %1110 = vmatpush.msra.mxu0 %v312
    %1111 = vmatpush.msra.mxu0 %v308
    %1112 = vmatpush.msra.mxu0 %v304
    %1113 = vmatpush.msra.mxu0 %v300
    %1114 = vmatpush.msra.mxu0 %v296
    %1115 = vmatpush.msra.mxu0 %v292
    %1116 = vmatpush.msra.mxu0 %v288
    %1117 = vmatpush.msra.mxu0 %v284
    %1118 = vmatmul.f32.gmra.mxu0 %v1081
    %v1119 = vpop.f32.mrf.mxu0
    %v1120 = vadd.f32 0.0, %v1119
    %1121 = vdwg.mxu0
    %1122 = vmatpush.msra.mxu0 %v345
    %1123 = vmatpush.msra.mxu0 %v341
    %1124 = vmatpush.msra.mxu0 %v337
    %1125 = vmatpush.msra.mxu0 %v333
    %1126 = vmatpush.msra.mxu0 %v329
    %1127 = vmatpush.msra.mxu0 %v325
    %1128 = vmatpush.msra.mxu0 %v321
    %1129 = vmatpush.msra.mxu0 %v317
    %1130 = vmatpush.msra.mxu0 %v313
    %1131 = vmatpush.msra.mxu0 %v309
    %1132 = vmatpush.msra.mxu0 %v305
    %1133 = vmatpush.msra.mxu0 %v301
    %1134 = vmatpush.msra.mxu0 %v297
    %1135 = vmatpush.msra.mxu0 %v293
    %1136 = vmatpush.msra.mxu0 %v289
    %1137 = vmatpush.msra.mxu0 %v285
    %1138 = vmatmul.f32.gmra.mxu0 %v1081
    %v1139 = vpop.f32.mrf.mxu0
    %v1140 = vadd.f32 0.0, %v1139
    %1141 = vdwg.mxu0
    %1142 = vmatpush.msra.mxu0 %v346
    %1143 = vmatpush.msra.mxu0 %v342
    %1144 = vmatpush.msra.mxu0 %v338
    %1145 = vmatpush.msra.mxu0 %v334
    %1146 = vmatpush.msra.mxu0 %v330
    %1147 = vmatpush.msra.mxu0 %v326
    %1148 = vmatpush.msra.mxu0 %v322
    %1149 = vmatpush.msra.mxu0 %v318
    %1150 = vmatpush.msra.mxu0 %v314
    %1151 = vmatpush.msra.mxu0 %v310
    %1152 = vmatpush.msra.mxu0 %v306
    %1153 = vmatpush.msra.mxu0 %v302
    %1154 = vmatpush.msra.mxu0 %v298
    %1155 = vmatpush.msra.mxu0 %v294
    %1156 = vmatpush.msra.mxu0 %v290
    %1157 = vmatpush.msra.mxu0 %v286
    %1158 = vmatmul.f32.gmra.mxu0 %v1081
    %v1159 = vpop.f32.mrf.mxu0
    %v1160 = vadd.f32 0.0, %v1159
    %1161 = vdwg.mxu0
    %v1162 = vadd.f32 %v152, %v1100
    %v1163 = vadd.f32 %v193, %v1120
    %v1164 = vadd.f32 %v234, %v1140
    %v1165 = vadd.f32 %v275, %v1160
    %v1166 = vxor.u32 %v1162, 2147483648
    %v1167 = vmul.f32 %v1166, 1.442695
    %v1168 = vpow.pop %v1167
    %v1169 = vadd.f32 %v1168, 1.0
    %v1170 = vrcp.pop %v1169
    %v1171 = vmul.f32 %v1169, %v1170
    %v1172 = vsub.f32 1.0, %v1171
    %v1173 = vmul.f32 %v1170, %v1172
    %v1174 = vadd.f32 %v1170, %v1173
    %vm1175 = vweird.f32 %v1169
    %vm1176 = vweird.f32 %v1170
    %vm1177 = vmor %vm1175, %vm1176
    %v1178 = vsel %vm1177, %v1170, %v1174
    %v1179 = vand.u32 2147483647, %v1169
    %vm1180 = vcmp.eq.f32.partialorder %v1179, 8.507059e+37
    %v1181 = vand.u32 %v1169, 2147483648
    %v1182 = vor.u32 1.1754944e-38, %v1181
    %v1183 = vsel %vm1180, %v1182, %v1178
    %v1184 = vmul.f32 1.0, %v1183
    %v1185 = vxor.u32 %v1163, 2147483648
    %v1186 = vmul.f32 %v1185, 1.442695
    %v1187 = vpow.pop %v1186
    %v1188 = vadd.f32 %v1187, 1.0
    %v1189 = vrcp.pop %v1188
    %v1190 = vmul.f32 %v1188, %v1189
    %v1191 = vsub.f32 1.0, %v1190
    %v1192 = vmul.f32 %v1189, %v1191
    %v1193 = vadd.f32 %v1189, %v1192
    %vm1194 = vweird.f32 %v1188
    %vm1195 = vweird.f32 %v1189
    %vm1196 = vmor %vm1194, %vm1195
    %v1197 = vsel %vm1196, %v1189, %v1193
    %v1198 = vand.u32 2147483647, %v1188
    %vm1199 = vcmp.eq.f32.partialorder %v1198, 8.507059e+37
    %v1200 = vand.u32 %v1188, 2147483648
    %v1201 = vor.u32 1.1754944e-38, %v1200
    %v1202 = vsel %vm1199, %v1201, %v1197
    %v1203 = vmul.f32 1.0, %v1202
    %v1204 = vtanh.pop %v1164
    %v1205 = vxor.u32 %v1165, 2147483648
    %v1206 = vmul.f32 %v1205, 1.442695
    %v1207 = vpow.pop %v1206
    %v1208 = vadd.f32 %v1207, 1.0
    %v1209 = vrcp.pop %v1208
    %v1210 = vmul.f32 %v1208, %v1209
    %v1211 = vsub.f32 1.0, %v1210
    %v1212 = vmul.f32 %v1209, %v1211
    %v1213 = vadd.f32 %v1209, %v1212
    %vm1214 = vweird.f32 %v1208
    %vm1215 = vweird.f32 %v1209
    %vm1216 = vmor %vm1214, %vm1215
    %v1217 = vsel %vm1216, %v1209, %v1213
    %v1218 = vand.u32 2147483647, %v1208
    %vm1219 = vcmp.eq.f32.partialorder %v1218, 8.507059e+37
    %v1220 = vand.u32 %v1208, 2147483648
    %v1221 = vor.u32 1.1754944e-38, %v1220
    %v1222 = vsel %vm1219, %v1221, %v1217
    %v1223 = vmul.f32 1.0, %v1222
    %v1224 = vmul.f32 %v1203, %v1079
    %v1225 = vmul.f32 %v1184, %v1204
    %v1226 = vadd.f32 %v1224, %v1225
    %v1227 = vtanh.pop %v1226
    %v1228 = vmul.f32 %v1223, %v1227
    %1229 = vmatpush.msra.mxu0 %v343
    %1230 = vmatpush.msra.mxu0 %v339
    %1231 = vmatpush.msra.mxu0 %v335
    %1232 = vmatpush.msra.mxu0 %v331
    %1233 = vmatpush.msra.mxu0 %v327
    %1234 = vmatpush.msra.mxu0 %v323
    %1235 = vmatpush.msra.mxu0 %v319
    %1236 = vmatpush.msra.mxu0 %v315
    %1237 = vmatpush.msra.mxu0 %v311
    %1238 = vmatpush.msra.mxu0 %v307
    %1239 = vmatpush.msra.mxu0 %v303
    %1240 = vmatpush.msra.mxu0 %v299
    %1241 = vmatpush.msra.mxu0 %v295
    %1242 = vmatpush.msra.mxu0 %v291
    %1243 = vmatpush.msra.mxu0 %v287
    %1244 = vmatpush.msra.mxu0 %v283
    %1245 = vmatmul.f32.gmra.mxu0 %v1228
    %v1246 = vpop.f32.mrf.mxu0
    %v1247 = vadd.f32 0.0, %v1246
    %1248 = vdwg.mxu0
    %1249 = vmatpush.msra.mxu0 %v344
    %1250 = vmatpush.msra.mxu0 %v340
    %1251 = vmatpush.msra.mxu0 %v336
    %1252 = vmatpush.msra.mxu0 %v332
    %1253 = vmatpush.msra.mxu0 %v328
    %1254 = vmatpush.msra.mxu0 %v324
    %1255 = vmatpush.msra.mxu0 %v320
    %1256 = vmatpush.msra.mxu0 %v316
    %1257 = vmatpush.msra.mxu0 %v312
    %1258 = vmatpush.msra.mxu0 %v308
    %1259 = vmatpush.msra.mxu0 %v304
    %1260 = vmatpush.msra.mxu0 %v300
    %1261 = vmatpush.msra.mxu0 %v296
    %1262 = vmatpush.msra.mxu0 %v292
    %1263 = vmatpush.msra.mxu0 %v288
    %1264 = vmatpush.msra.mxu0 %v284
    %1265 = vmatmul.f32.gmra.mxu0 %v1228
    %v1266 = vpop.f32.mrf.mxu0
    %v1267 = vadd.f32 0.0, %v1266
    %1268 = vdwg.mxu0
    %1269 = vmatpush.msra.mxu0 %v345
    %1270 = vmatpush.msra.mxu0 %v341
    %1271 = vmatpush.msra.mxu0 %v337
    %1272 = vmatpush.msra.mxu0 %v333
    %1273 = vmatpush.msra.mxu0 %v329
    %1274 = vmatpush.msra.mxu0 %v325
    %1275 = vmatpush.msra.mxu0 %v321
    %1276 = vmatpush.msra.mxu0 %v317
    %1277 = vmatpush.msra.mxu0 %v313
    %1278 = vmatpush.msra.mxu0 %v309
    %1279 = vmatpush.msra.mxu0 %v305
    %1280 = vmatpush.msra.mxu0 %v301
    %1281 = vmatpush.msra.mxu0 %v297
    %1282 = vmatpush.msra.mxu0 %v293
    %1283 = vmatpush.msra.mxu0 %v289
    %1284 = vmatpush.msra.mxu0 %v285
    %1285 = vmatmul.f32.gmra.mxu0 %v1228
    %v1286 = vpop.f32.mrf.mxu0
    %v1287 = vadd.f32 0.0, %v1286
    %1288 = vdwg.mxu0
    %1289 = vmatpush.msra.mxu0 %v346
    %1290 = vmatpush.msra.mxu0 %v342
    %1291 = vmatpush.msra.mxu0 %v338
    %1292 = vmatpush.msra.mxu0 %v334
    %1293 = vmatpush.msra.mxu0 %v330
    %1294 = vmatpush.msra.mxu0 %v326
    %1295 = vmatpush.msra.mxu0 %v322
    %1296 = vmatpush.msra.mxu0 %v318
    %1297 = vmatpush.msra.mxu0 %v314
    %1298 = vmatpush.msra.mxu0 %v310
    %1299 = vmatpush.msra.mxu0 %v306
    %1300 = vmatpush.msra.mxu0 %v302
    %1301 = vmatpush.msra.mxu0 %v298
    %1302 = vmatpush.msra.mxu0 %v294
    %1303 = vmatpush.msra.mxu0 %v290
    %1304 = vmatpush.msra.mxu0 %v286
    %1305 = vmatmul.f32.gmra.mxu0 %v1228
    %v1306 = vpop.f32.mrf.mxu0
    %v1307 = vadd.f32 0.0, %v1306
    %1308 = vdwg.mxu0
    %v1309 = vadd.f32 %v155, %v1247
    %v1310 = vadd.f32 %v196, %v1267
    %v1311 = vadd.f32 %v237, %v1287
    %v1312 = vadd.f32 %v278, %v1307
    %v1313 = vxor.u32 %v1309, 2147483648
    %v1314 = vmul.f32 %v1313, 1.442695
    %v1315 = vpow.pop %v1314
    %v1316 = vadd.f32 %v1315, 1.0
    %v1317 = vrcp.pop %v1316
    %v1318 = vmul.f32 %v1316, %v1317
    %v1319 = vsub.f32 1.0, %v1318
    %v1320 = vmul.f32 %v1317, %v1319
    %v1321 = vadd.f32 %v1317, %v1320
    %vm1322 = vweird.f32 %v1316
    %vm1323 = vweird.f32 %v1317
    %vm1324 = vmor %vm1322, %vm1323
    %v1325 = vsel %vm1324, %v1317, %v1321
    %v1326 = vand.u32 2147483647, %v1316
    %vm1327 = vcmp.eq.f32.partialorder %v1326, 8.507059e+37
    %v1328 = vand.u32 %v1316, 2147483648
    %v1329 = vor.u32 1.1754944e-38, %v1328
    %v1330 = vsel %vm1327, %v1329, %v1325
    %v1331 = vmul.f32 1.0, %v1330
    %v1332 = vxor.u32 %v1310, 2147483648
    %v1333 = vmul.f32 %v1332, 1.442695
    %v1334 = vpow.pop %v1333
    %v1335 = vadd.f32 %v1334, 1.0
    %v1336 = vrcp.pop %v1335
    %v1337 = vmul.f32 %v1335, %v1336
    %v1338 = vsub.f32 1.0, %v1337
    %v1339 = vmul.f32 %v1336, %v1338
    %v1340 = vadd.f32 %v1336, %v1339
    %vm1341 = vweird.f32 %v1335
    %vm1342 = vweird.f32 %v1336
    %vm1343 = vmor %vm1341, %vm1342
    %v1344 = vsel %vm1343, %v1336, %v1340
    %v1345 = vand.u32 2147483647, %v1335
    %vm1346 = vcmp.eq.f32.partialorder %v1345, 8.507059e+37
    %v1347 = vand.u32 %v1335, 2147483648
    %v1348 = vor.u32 1.1754944e-38, %v1347
    %v1349 = vsel %vm1346, %v1348, %v1344
    %v1350 = vmul.f32 1.0, %v1349
    %v1351 = vtanh.pop %v1311
    %v1352 = vxor.u32 %v1312, 2147483648
    %v1353 = vmul.f32 %v1352, 1.442695
    %v1354 = vpow.pop %v1353
    %v1355 = vadd.f32 %v1354, 1.0
    %v1356 = vrcp.pop %v1355
    %v1357 = vmul.f32 %v1355, %v1356
    %v1358 = vsub.f32 1.0, %v1357
    %v1359 = vmul.f32 %v1356, %v1358
    %v1360 = vadd.f32 %v1356, %v1359
    %vm1361 = vweird.f32 %v1355
    %vm1362 = vweird.f32 %v1356
    %vm1363 = vmor %vm1361, %vm1362
    %v1364 = vsel %vm1363, %v1356, %v1360
    %v1365 = vand.u32 2147483647, %v1355
    %vm1366 = vcmp.eq.f32.partialorder %v1365, 8.507059e+37
    %v1367 = vand.u32 %v1355, 2147483648
    %v1368 = vor.u32 1.1754944e-38, %v1367
    %v1369 = vsel %vm1366, %v1368, %v1364
    %v1370 = vmul.f32 1.0, %v1369
    %v1371 = vmul.f32 %v1350, %v1226
    %v1372 = vmul.f32 %v1331, %v1351
    %v1373 = vadd.f32 %v1371, %v1372
    %v1374 = vtanh.pop %v1373
    %v1375 = vmul.f32 %v1370, %v1374
    %1376 = vmatpush.msra.mxu0 %v343
    %1377 = vmatpush.msra.mxu0 %v339
    %1378 = vmatpush.msra.mxu0 %v335
    %1379 = vmatpush.msra.mxu0 %v331
    %1380 = vmatpush.msra.mxu0 %v327
    %1381 = vmatpush.msra.mxu0 %v323
    %1382 = vmatpush.msra.mxu0 %v319
    %1383 = vmatpush.msra.mxu0 %v315
    %1384 = vmatpush.msra.mxu0 %v311
    %1385 = vmatpush.msra.mxu0 %v307
    %1386 = vmatpush.msra.mxu0 %v303
    %1387 = vmatpush.msra.mxu0 %v299
    %1388 = vmatpush.msra.mxu0 %v295
    %1389 = vmatpush.msra.mxu0 %v291
    %1390 = vmatpush.msra.mxu0 %v287
    %1391 = vmatpush.msra.mxu0 %v283
    %1392 = vmatmul.f32.gmra.mxu0 %v1375
    %v1393 = vpop.f32.mrf.mxu0
    %v1394 = vadd.f32 0.0, %v1393
    %1395 = vdwg.mxu0
    %1396 = vmatpush.msra.mxu0 %v344
    %1397 = vmatpush.msra.mxu0 %v340
    %1398 = vmatpush.msra.mxu0 %v336
    %1399 = vmatpush.msra.mxu0 %v332
    %1400 = vmatpush.msra.mxu0 %v328
    %1401 = vmatpush.msra.mxu0 %v324
    %1402 = vmatpush.msra.mxu0 %v320
    %1403 = vmatpush.msra.mxu0 %v316
    %1404 = vmatpush.msra.mxu0 %v312
    %1405 = vmatpush.msra.mxu0 %v308
    %1406 = vmatpush.msra.mxu0 %v304
    %1407 = vmatpush.msra.mxu0 %v300
    %1408 = vmatpush.msra.mxu0 %v296
    %1409 = vmatpush.msra.mxu0 %v292
    %1410 = vmatpush.msra.mxu0 %v288
    %1411 = vmatpush.msra.mxu0 %v284
    %1412 = vmatmul.f32.gmra.mxu0 %v1375
    %v1413 = vpop.f32.mrf.mxu0
    %v1414 = vadd.f32 0.0, %v1413
    %1415 = vdwg.mxu0
    %1416 = vmatpush.msra.mxu0 %v345
    %1417 = vmatpush.msra.mxu0 %v341
    %1418 = vmatpush.msra.mxu0 %v337
    %1419 = vmatpush.msra.mxu0 %v333
    %1420 = vmatpush.msra.mxu0 %v329
    %1421 = vmatpush.msra.mxu0 %v325
    %1422 = vmatpush.msra.mxu0 %v321
    %1423 = vmatpush.msra.mxu0 %v317
    %1424 = vmatpush.msra.mxu0 %v313
    %1425 = vmatpush.msra.mxu0 %v309
    %1426 = vmatpush.msra.mxu0 %v305
    %1427 = vmatpush.msra.mxu0 %v301
    %1428 = vmatpush.msra.mxu0 %v297
    %1429 = vmatpush.msra.mxu0 %v293
    %1430 = vmatpush.msra.mxu0 %v289
    %1431 = vmatpush.msra.mxu0 %v285
    %1432 = vmatmul.f32.gmra.mxu0 %v1375
    %v1433 = vpop.f32.mrf.mxu0
    %v1434 = vadd.f32 0.0, %v1433
    %1435 = vdwg.mxu0
    %1436 = vmatpush.msra.mxu0 %v346
    %1437 = vmatpush.msra.mxu0 %v342
    %1438 = vmatpush.msra.mxu0 %v338
    %1439 = vmatpush.msra.mxu0 %v334
    %1440 = vmatpush.msra.mxu0 %v330
    %1441 = vmatpush.msra.mxu0 %v326
    %1442 = vmatpush.msra.mxu0 %v322
    %1443 = vmatpush.msra.mxu0 %v318
    %1444 = vmatpush.msra.mxu0 %v314
    %1445 = vmatpush.msra.mxu0 %v310
    %1446 = vmatpush.msra.mxu0 %v306
    %1447 = vmatpush.msra.mxu0 %v302
    %1448 = vmatpush.msra.mxu0 %v298
    %1449 = vmatpush.msra.mxu0 %v294
    %1450 = vmatpush.msra.mxu0 %v290
    %1451 = vmatpush.msra.mxu0 %v286
    %1452 = vmatmul.f32.gmra.mxu0 %v1375
    %v1453 = vpop.f32.mrf.mxu0
    %v1454 = vadd.f32 0.0, %v1453
    %1455 = vdwg.mxu0
    %v1456 = vadd.f32 %v158, %v1394
    %v1457 = vadd.f32 %v199, %v1414
    %v1458 = vadd.f32 %v240, %v1434
    %v1459 = vadd.f32 %v281, %v1454
    %v1460 = vxor.u32 %v1456, 2147483648
    %v1461 = vmul.f32 %v1460, 1.442695
    %v1462 = vpow.pop %v1461
    %v1463 = vadd.f32 %v1462, 1.0
    %v1464 = vrcp.pop %v1463
    %v1465 = vmul.f32 %v1463, %v1464
    %v1466 = vsub.f32 1.0, %v1465
    %v1467 = vmul.f32 %v1464, %v1466
    %v1468 = vadd.f32 %v1464, %v1467
    %vm1469 = vweird.f32 %v1463
    %vm1470 = vweird.f32 %v1464
    %vm1471 = vmor %vm1469, %vm1470
    %v1472 = vsel %vm1471, %v1464, %v1468
    %v1473 = vand.u32 2147483647, %v1463
    %vm1474 = vcmp.eq.f32.partialorder %v1473, 8.507059e+37
    %v1475 = vand.u32 %v1463, 2147483648
    %v1476 = vor.u32 1.1754944e-38, %v1475
    %v1477 = vsel %vm1474, %v1476, %v1472
    %v1478 = vmul.f32 1.0, %v1477
    %v1479 = vxor.u32 %v1457, 2147483648
    %v1480 = vmul.f32 %v1479, 1.442695
    %v1481 = vpow.pop %v1480
    %v1482 = vadd.f32 %v1481, 1.0
    %v1483 = vrcp.pop %v1482
    %v1484 = vmul.f32 %v1482, %v1483
    %v1485 = vsub.f32 1.0, %v1484
    %v1486 = vmul.f32 %v1483, %v1485
    %v1487 = vadd.f32 %v1483, %v1486
    %vm1488 = vweird.f32 %v1482
    %vm1489 = vweird.f32 %v1483
    %vm1490 = vmor %vm1488, %vm1489
    %v1491 = vsel %vm1490, %v1483, %v1487
    %v1492 = vand.u32 2147483647, %v1482
    %vm1493 = vcmp.eq.f32.partialorder %v1492, 8.507059e+37
    %v1494 = vand.u32 %v1482, 2147483648
    %v1495 = vor.u32 1.1754944e-38, %v1494
    %v1496 = vsel %vm1493, %v1495, %v1491
    %v1497 = vmul.f32 1.0, %v1496
    %v1498 = vtanh.pop %v1458
    %v1499 = vxor.u32 %v1459, 2147483648
    %v1500 = vmul.f32 %v1499, 1.442695
    %v1501 = vpow.pop %v1500
    %v1502 = vadd.f32 %v1501, 1.0
    %v1503 = vrcp.pop %v1502
    %v1504 = vmul.f32 %v1502, %v1503
    %v1505 = vsub.f32 1.0, %v1504
    %v1506 = vmul.f32 %v1503, %v1505
    %v1507 = vadd.f32 %v1503, %v1506
    %vm1508 = vweird.f32 %v1502
    %vm1509 = vweird.f32 %v1503
    %vm1510 = vmor %vm1508, %vm1509
    %v1511 = vsel %vm1510, %v1503, %v1507
    %v1512 = vand.u32 2147483647, %v1502
    %vm1513 = vcmp.eq.f32.partialorder %v1512, 8.507059e+37
    %v1514 = vand.u32 %v1502, 2147483648
    %v1515 = vor.u32 1.1754944e-38, %v1514
    %v1516 = vsel %vm1513, %v1515, %v1511
    %v1517 = vmul.f32 1.0, %v1516
    %v1518 = vmul.f32 %v1497, %v1373
    %v1519 = vmul.f32 %v1478, %v1498
    %v1520 = vadd.f32 %v1518, %v1519
    %v1521 = vtanh.pop %v1520
    %v1522 = vmul.f32 %v1517, %v1521
    %v1523 = vld [vmem:[#allocation5] sm:$0xff]
    %v1524 = vld [vmem:[#allocation5 + $0x8] sm:$0xff]
    %v1525 = vld [vmem:[#allocation5 + $0x10] sm:$0xff]
    %v1526 = vld [vmem:[#allocation5 + $0x18] sm:$0xff]
    %v1527 = vld [vmem:[#allocation5 + $0x20] sm:$0xff]
    %v1528 = vld [vmem:[#allocation5 + $0x28] sm:$0xff]
    %v1529 = vld [vmem:[#allocation5 + $0x30] sm:$0xff]
    %v1530 = vld [vmem:[#allocation5 + $0x38] sm:$0xff]
    %v1531 = vld [vmem:[#allocation5 + $0x40] sm:$0xff]
    %v1532 = vld [vmem:[#allocation5 + $0x48] sm:$0xff]
    %v1533 = vld [vmem:[#allocation5 + $0x50] sm:$0xff]
    %v1534 = vld [vmem:[#allocation5 + $0x58] sm:$0xff]
    %v1535 = vld [vmem:[#allocation5 + $0x60] sm:$0xff]
    %v1536 = vld [vmem:[#allocation5 + $0x68] sm:$0xff]
    %v1537 = vld [vmem:[#allocation5 + $0x70] sm:$0xff]
    %v1538 = vld [vmem:[#allocation5 + $0x78] sm:$0xff]
    %v1539 = vld [vmem:[#allocation5 + $0x80] sm:$0xff]
    %v1540 = vld [vmem:[#allocation5 + $0x88] sm:$0xff]
    %v1541 = vld [vmem:[#allocation5 + $0x90] sm:$0xff]
    %v1542 = vld [vmem:[#allocation5 + $0x98] sm:$0xff]
    %v1543 = vld [vmem:[#allocation5 + $0xa0] sm:$0xff]
    %v1544 = vld [vmem:[#allocation5 + $0xa8] sm:$0xff]
    %v1545 = vld [vmem:[#allocation5 + $0xb0] sm:$0xff]
    %v1546 = vld [vmem:[#allocation5 + $0xb8] sm:$0xff]
    %v1547 = vld [vmem:[#allocation5 + $0xc0] sm:$0xff]
    %v1548 = vld [vmem:[#allocation5 + $0xc8] sm:$0xff]
    %v1549 = vld [vmem:[#allocation5 + $0xd0] sm:$0xff]
    %v1550 = vld [vmem:[#allocation5 + $0xd8] sm:$0xff]
    %v1551 = vld [vmem:[#allocation5 + $0xe0] sm:$0xff]
    %v1552 = vld [vmem:[#allocation5 + $0xe8] sm:$0xff]
    %v1553 = vld [vmem:[#allocation5 + $0xf0] sm:$0xff]
    %v1554 = vld [vmem:[#allocation5 + $0xf8] sm:$0xff]
    %v1555 = vld [vmem:[%s5] sm:$0x3]
    %v1557 = vperm.slane %v1555, 0
    %v1558 = vperm.slane %v1555, 1
    %1561 = vmatpush.msra.mxu0 %v1553
    %1562 = vmatpush.msra.mxu0 %v1551
    %1563 = vmatpush.msra.mxu0 %v1549
    %1564 = vmatpush.msra.mxu0 %v1547
    %1565 = vmatpush.msra.mxu0 %v1545
    %1566 = vmatpush.msra.mxu0 %v1543
    %1567 = vmatpush.msra.mxu0 %v1541
    %1568 = vmatpush.msra.mxu0 %v1539
    %1569 = vmatpush.msra.mxu0 %v1537
    %1570 = vmatpush.msra.mxu0 %v1535
    %1571 = vmatpush.msra.mxu0 %v1533
    %1572 = vmatpush.msra.mxu0 %v1531
    %1573 = vmatpush.msra.mxu0 %v1529
    %1574 = vmatpush.msra.mxu0 %v1527
    %1575 = vmatpush.msra.mxu0 %v1525
    %1576 = vmatpush.msra.mxu0 %v1523
    %1577 = vmatmul.f32.gmra.mxu0 %v1522
    %v1578 = vpop.f32.mrf.mxu0
    %v1579 = vadd.f32 %v1557, %v1578
    %1580 = vdwg.mxu0
    %1581 = vmatpush.msra.mxu0 %v1554
    %1582 = vmatpush.msra.mxu0 %v1552
    %1583 = vmatpush.msra.mxu0 %v1550
    %1584 = vmatpush.msra.mxu0 %v1548
    %1585 = vmatpush.msra.mxu0 %v1546
    %1586 = vmatpush.msra.mxu0 %v1544
    %1587 = vmatpush.msra.mxu0 %v1542
    %1588 = vmatpush.msra.mxu0 %v1540
    %1589 = vmatpush.msra.mxu0 %v1538
    %1590 = vmatpush.msra.mxu0 %v1536
    %1591 = vmatpush.msra.mxu0 %v1534
    %1592 = vmatpush.msra.mxu0 %v1532
    %1593 = vmatpush.msra.mxu0 %v1530
    %1594 = vmatpush.msra.mxu0 %v1528
    %1595 = vmatpush.msra.mxu0 %v1526
    %1596 = vmatpush.msra.mxu0 %v1524
    %1597 = vmatmul.f32.gmra.mxu0 %v1522
    %v1598 = vpop.f32.mrf.mxu0
    %v1599 = vadd.f32 %v1558, %v1598
    %1600 = vdwg.mxu0
    %1601 = vst [vmem:[#allocation7] sm:$0xff] %v1579
    %1602 = vst [vmem:[#allocation7 + $0x8] sm:$0xff] %v1599
    // Predicated region
    $region34: #{tpu_custom_call.1} parent=1 // pred_check
      _
    $region35: #{tpu_custom_call.1} parent=1 // pred_check_branch
      %1604 = sbr.rel (0) target = $region37
    $region36: #{tpu_custom_call.1} parent=1 // pred_region
      %1606 = vsyncadd [#allocation4], 0
      %s1608 = sshll.u32 [#allocation7], 4
      %s1609 = int_to_ptr.vmem [resolvable:$true] %s1608
      %s1610 = sshll.u32 %s6, 4
      %s1611 = int_to_ptr.hbm [resolvable:$true] %s1610
      %1613 = dma.vmem_to_hbm [thread:$0]  %s1609, 256, %s1611, [#allocation4]
    $region37: #{tpu_custom_call.1} parent=1 // pred_fallthru
      _
    // Predicated region
    $region38: #{tpu_custom_call.1} parent=1 // pred_check
      _
    $region39: #{tpu_custom_call.1} parent=1 // pred_check_branch
      %1615 = sbr.rel (0) target = $region41
    $region40: #{tpu_custom_call.1} parent=1 // pred_region
      %1617 = dma.done [#allocation4], 256
    $region41: #{tpu_custom_call.1} parent=1 // pred_fallthru
      _
    %1618 = vsyncpa [#allocation3], 1
    %1619 = vsyncpa [#allocation6], 1
    %1620 = vsyncpa [#allocation4], 1

</llo_original>
